<compile_context>
chip_gen: v6e
topology: v6e:2x2x1
jax: 0.10.0
libtpu: 0.0.40
codegen_flags: <defaults>
</compile_context>

<pallas_src>
import math
import jax
import jax.numpy as jnp
from jax import lax
from jax.experimental import pallas as pl
from jax.experimental.pallas import tpu as pltpu

NEG_INF = -1e30
LEAKY_SLOPE = 0.2   # GATConv default negative_slope


def _pick_vmem_limit():
    """Physical VMEM minus headroom: ~112 MiB on v5e/v6e, ~48 MiB on v7x."""
    default = 48 * 1024 * 1024          # safe on every generation
    try:
        cap = int(pltpu.get_tpu_info().vmem_capacity_bytes)
        return max(default, cap - 16 * 1024 * 1024)
    except Exception:
        return default


# --------------------------------------------------------------------------
# Fused forward kernel factory (static hidden size / head & layer counts).
# Ref order: x_in, pos, esc(blk), wc(blk), bc(blk), gb(blk), mha_w, mha_b,
#            [dec_w, dec_b]*num_dec, out, x_scratch
# --------------------------------------------------------------------------
def make_fused_kernel(hidden, fpad, num_heads, num_dec_linears, mode):
    H = hidden

    def kernel(*refs):
        (x_in_ref, pos_ref, esc_ref, wc_ref, bc_ref, gb_ref,
         mha_w_ref, mha_b_ref) = refs[:8]
        dec_refs = refs[8:8 + 2 * num_dec_linears]
        o_ref = refs[8 + 2 * num_dec_linears]
        x_st = refs[9 + 2 * num_dec_linears]           # (N, fpad) f32 carry

        l = pl.program_id(0)
        last = pl.num_programs(0) - 1

        @pl.when(l == 0)
        def _():
            x_st[...] = x_in_ref[...]                  # load embedded/pos-overwritten x

        # ---------------- GATConv layer l (+ fused F.relu) ----------------
        x_bf = x_st[...].astype(jnp.bfloat16)
        # Single matmul emits [h | s_dst | 1 | s_src]; a-vectors folded into W
        # in glue, the constant-1 column comes from the combined bias.
        hs = jnp.dot(x_bf, wc_ref[...],
                     preferred_element_type=jnp.float32) + bc_ref[...]      # (N, H+3)
        h = hs[:, :H]
        # e[i,j] = s_dst[i] + s_src[j] as ONE K=2 outer product: no (N,N) temp.
        e = lax.dot_general(hs[:, H:H + 2], hs[:, H + 1:H + 3],
                            (((1,), (1,)), ((), ())),
                            preferred_element_type=jnp.float32)             # (N, N)
        e = e + esc_ref[...].astype(jnp.float32)    # edge logit; NEG_INF on non-edges
        e = jnp.where(e > 0, e, LEAKY_SLOPE * e)    # LeakyReLU(0.2)
        # NOTE(masking): NEG_INF*0.2 is still ~-2e29, so exp underflows to
        # exactly 0 for non-edges; self-loops keep every row max finite.
        m = jnp.max(e, axis=-1, keepdims=True)
        p = jnp.exp(e - m)                          # unnormalized probs in [0,1]
        denom = jnp.sum(p, axis=-1, keepdims=True)
        # normalize AFTER the PV matmul: an (N,H) multiply instead of (N,N)
        agg = jnp.dot(p.astype(jnp.bfloat16), h.astype(jnp.bfloat16),
                      preferred_element_type=jnp.float32)
        agg = agg * pl.reciprocal(denom, approx=True) + gb_ref[...]
        xnew = jnp.maximum(agg, 0.0)                # F.relu fused
        # TODO(synk): F.dropout omitted (eval-mode / deterministic run)
        if H == fpad:
            x_st[...] = xnew
        else:
            x_st[:, :H] = xnew                      # pad lanes hit zero weight rows later

        # --------- MHA + decoder tail only on the last conv layer ---------
        @pl.when(l == last)
        def _():
            xb = xnew.astype(jnp.bfloat16)
            # all head linears in ONE matmul
            hx_all = jnp.dot(xb, mha_w_ref[...],
                             preferred_element_type=jnp.float32) + mha_b_ref[...]
            parts = [xnew]
            for hh in range(num_heads):
                hx = hx_all[:, hh * H:(hh + 1) * H].astype(jnp.bfloat16)
                sc = lax.dot_general(hx, hx, (((1,), (1,)), ((), ())),
                                     preferred_element_type=jnp.float32)    # (N, N)
                mm = jnp.max(sc, axis=-1, keepdims=True)
                pp = jnp.exp(sc - mm)
                dd = jnp.sum(pp, axis=-1, keepdims=True)
                ov = jnp.dot(pp.astype(jnp.bfloat16), xb,
                             preferred_element_type=jnp.float32)            # (N, H)
                parts.append(ov * pl.reciprocal(dd, approx=True))           # post-PV norm

            # decoder MLP: first Linear consumes the (heads+1)*H concat as
            # row-block matmuls (no in-kernel lane concat/relayout)
            z = None
            for li in range(num_dec_linears):
                w_ref = dec_refs[2 * li]
                b_ref = dec_refs[2 * li + 1]
                if li == 0:
                    wfull = w_ref[...]                               # ((heads+1)*H, out) bf16
                    z = jnp.dot(parts[0].astype(jnp.bfloat16), wfull[0:H, :],
                                preferred_element_type=jnp.float32) + b_ref[...]
                    for pi in range(1, len(parts)):
                        z = z + jnp.dot(parts[pi].astype(jnp.bfloat16),
                                        wfull[pi * H:(pi + 1) * H, :],
                                        preferred_element_type=jnp.float32)
                else:
                    z = jnp.dot(z.astype(jnp.bfloat16), w_ref[...],
                                preferred_element_type=jnp.float32) + b_ref[...]
                if li < num_dec_linears - 1:
                    z = jnp.maximum(z, 0.0)          # ReLU (Dropout = identity in eval)

            if mode == "res":
                z = pos_ref[...] + z                 # deformed_graph.pos += x_out
            elif mode != "rec":
                z = pos_ref[...]
            o_ref[...] = z

    return kernel


# --------------------------------------------------------------------------
# GraphNet forward (glue + single fused pallas_call with grid over conv layers)
# --------------------------------------------------------------------------
def graphnet_forward(params, elements, pos, batch, edge_index, edge_attr,
                     mode="res"):
    del batch  # per-graph cutoff loop in torch == one x[:, -3:] = pos write over all nodes
    # glue: nn.Embedding row gather + positional overwrite (scatter/gather kept in XLA)
    x = params["emb"][elements]
    x = x.at[:, -3:].set(pos)
    n = x.shape[0]
    convs = params["convs"]
    L = len(convs)
    hidden = convs[0]["w"].shape[1]
    heads = params["mha_w"].shape[0]
    dec = params["decoder"]
    out_dim = dec[-1][0].shape[1]
    fin0 = x.shape[1]
    fpad = max(fin0, hidden)
    if fin0 < fpad:
        # pad feature lanes; padded weight rows are zero so the matmuls are exact
        x = jnp.pad(x, ((0, 0), (0, fpad - fin0)))

    # glue: densify edge logits for ALL conv layers with a single scatter;
    # adjacency mask baked in as NEG_INF so the kernel needs no separate adj tensor.
    src, dst = edge_index[0], edge_index[1]
    mean_attr = edge_attr.mean(axis=0)                         # self-loop fill_value='mean'
    es_all = jnp.stack([(edge_attr @ c["w_edge"].T) @ c["a_edge"] for c in convs])   # (L, E)
    es_self = jnp.stack([(mean_attr @ c["w_edge"].T) @ c["a_edge"] for c in convs])  # (L,)
    diag = jnp.arange(n)
    esc_all = jnp.full((L, n, n), NEG_INF, jnp.float32)
    esc_all = esc_all.at[:, dst, src].set(es_all)
    esc_all = esc_all.at[:, diag, diag].set(es_self[:, None])
    esc_all = esc_all.astype(jnp.bfloat16)                     # bf16 halves N×N HBM traffic

    # per-layer combined weight [W | W·a_dst | 0 | W·a_src] padded to fpad rows;
    # combined bias [0..0, 0, 1, 0] so hs = x@Wc + bc yields columns [h|s_dst|1|s_src]
    wc_list, bc_list, gb_list = [], [], []
    for c in convs:
        w = c["w"]                                   # (Fin, H) f32
        wa_dst = w @ c["a_dst"].T                    # (Fin, 1)
        wa_src = w @ c["a_src"].T                    # (Fin, 1)
        wcomb = jnp.concatenate(
            [w, wa_dst, jnp.zeros((w.shape[0], 1), w.dtype), wa_src], axis=1)
        if w.shape[0] < fpad:
            wcomb = jnp.pad(wcomb, ((0, fpad - w.shape[0]), (0, 0)))
        bcomb = jnp.zeros((1, hidden + 3), jnp.float32).at[0, hidden + 1].set(1.0)
        wc_list.append(wcomb.astype(jnp.bfloat16))
        bc_list.append(bcomb)
        gb_list.append(c["bias"])
    wc_all = jnp.stack(wc_list)                      # (L, fpad, H+3) bf16
    bc_all = jnp.stack(bc_list)                      # (L, 1, H+3)  f32
    gb_all = jnp.stack(gb_list)                      # (L, 1, H)    f32

    mha_w_all = jnp.transpose(params["mha_w"], (1, 0, 2)).reshape(
        hidden, heads * hidden).astype(jnp.bfloat16)
    mha_b_all = params["mha_b"].reshape(1, heads * hidden)

    dec_flat = []
    for w, b in dec:
        dec_flat += [w.astype(jnp.bfloat16), b]
    num_dec = len(dec)

    args = [x, pos, esc_all, wc_all, bc_all, gb_all, mha_w_all, mha_b_all] + dec_flat

    res_spec = pl.BlockSpec(memory_space=pltpu.MemorySpace.VMEM)   # resident, loaded once
    in_specs = [
        res_spec,                                                   # x_in
        res_spec,                                                   # pos
        pl.BlockSpec((None, n, n), lambda l: (l, 0, 0)),            # esc streamed per layer
        pl.BlockSpec((None, fpad, hidden + 3), lambda l: (l, 0, 0)),# per-layer combined W
        pl.BlockSpec((None, 1, hidden + 3), lambda l: (l, 0, 0)),   # per-layer combined b
        pl.BlockSpec((None, 1, hidden), lambda l: (l, 0, 0)),       # per-layer GAT out bias
        res_spec, res_spec,                                         # mha_w, mha_b
    ] + [res_spec] * len(dec_flat)
    out_spec = pl.BlockSpec((n, out_dim), lambda l: (0, 0))         # written on last step

    # advisory cost estimate so XLA schedules the glue (gather/scatter) around the call
    flops = 0
    for _ in range(L):
        flops += 2 * n * fpad * (hidden + 3) + 4 * n * n + 2 * n * n * hidden
    flops += 2 * n * hidden * heads * hidden + heads * (4 * n * n * hidden)
    for w, _ in dec:
        flops += 2 * n * w.shape[0] * w.shape[1]
    bytes_accessed = sum(int(a.size) * a.dtype.itemsize for a in args) + n * out_dim * 4
    transcendentals = (L + heads) * n * n

    kernel = make_fused_kernel(hidden, fpad, heads, num_dec, mode)
    return pl.pallas_call(
        kernel,
        out_shape=jax.ShapeDtypeStruct((n, out_dim), jnp.float32),
        grid_spec=pltpu.PrefetchScalarGridSpec(
            num_scalar_prefetch=0,
            grid=(L,),
            in_specs=in_specs,
            out_specs=out_spec,
            scratch_shapes=[pltpu.VMEM((n, fpad), jnp.float32)],    # x carried across layers
        ),
        compiler_params=pltpu.CompilerParams(
            dimension_semantics=("arbitrary",),                     # layer axis carries state
            vmem_limit_bytes=_pick_vmem_limit()),
        cost_estimate=pl.CostEstimate(flops=int(flops),
                                      transcendentals=int(transcendentals),
                                      bytes_accessed=int(bytes_accessed)),
    )(*args)


# --------------------------------------------------------------------------
# Deterministic parameter init (synthetic; shapes from GraphNet.__init__)
# --------------------------------------------------------------------------
def init_params(key, input_dim, hidden, out_dim, enc_layers, dec_layers,
                edge_dim, mha_heads):
    keys = iter(jax.random.split(key, 64))
    p = {}
    p["emb"] = 0.1 * jax.random.normal(next(keys), (118, input_dim), jnp.float32)
    convs = []
    fin = input_dim
    for _ in range(enc_layers):
        convs.append(dict(
            w=jax.random.normal(next(keys), (fin, hidden), jnp.float32)
              / math.sqrt(fin),
            a_src=0.1 * jax.random.normal(next(keys), (1, hidden), jnp.float32),
            a_dst=0.1 * jax.random.normal(next(keys), (1, hidden), jnp.float32),
            a_edge=0.1 * jax.random.normal(next(keys), (hidden,), jnp.float32),
            w_edge=jax.random.normal(next(keys), (hidden, edge_dim), jnp.float32)
                   / math.sqrt(edge_dim),
            bias=jnp.zeros((1, hidden), jnp.float32),
        ))
        fin = hidden
    p["convs"] = convs
    # MHA linear weights stored pre-transposed so the kernel does x @ W
    p["mha_w"] = jax.random.normal(next(keys), (mha_heads, hidden, hidden),
                                   jnp.float32) / math.sqrt(hidden)
    p["mha_b"] = jnp.zeros((mha_heads, 1, hidden), jnp.float32)
    dec = []
    dec_in = hidden * (mha_heads + 1)                 # use_mha=True
    for _ in range(dec_layers):
        dec.append((jax.random.normal(next(keys), (dec_in, hidden), jnp.float32)
                    / math.sqrt(dec_in),
                    jnp.zeros((1, hidden), jnp.float32)))
        dec_in = hidden
    dec.append((jax.random.normal(next(keys), (dec_in, out_dim), jnp.float32)
                / math.sqrt(dec_in),
                jnp.zeros((1, out_dim), jnp.float32)))
    p["decoder"] = dec
    return p


if __name__ == "__main__":
    # Small, forward-consistent config
    N_PER_GRAPH = 8
    N_GRAPHS = 2
    N = N_PER_GRAPH * N_GRAPHS
    INPUT_DIMS = [8]
    HIDDEN = 32
    OUTPUT_DIM = 3
    ENC_LAYERS = 2
    DEC_LAYERS = 2
    EDGE_DIM = 4
    MHA_HEADS = 4
    MODE = "res"

    key = jax.random.PRNGKey(0)
    k_par, k_el, k_pos, k_ea = jax.random.split(key, 4)

    params = init_params(k_par, INPUT_DIMS[0], HIDDEN, OUTPUT_DIM,
                         ENC_LAYERS, DEC_LAYERS, EDGE_DIM, MHA_HEADS)

    elements = jax.random.randint(k_el, (N,), 0, 118, dtype=jnp.int32)
    pos = jax.random.normal(k_pos, (N, 3), jnp.float32)
    batch = jnp.repeat(jnp.arange(N_GRAPHS, dtype=jnp.int32), N_PER_GRAPH)

    # bidirectional chain edges within each graph
    src_list, dst_list = [], []
    for g in range(N_GRAPHS):
        base = g * N_PER_GRAPH
        for i in range(N_PER_GRAPH - 1):
            src_list += [base + i, base + i + 1]
            dst_list += [base + i + 1, base + i]
    edge_index = jnp.array([src_list, dst_list], dtype=jnp.int32)   # (2, E)
    E = edge_index.shape[1]
    edge_attr = jax.random.normal(k_ea, (E, EDGE_DIM), jnp.float32)

    out_pos = graphnet_forward(params, elements, pos, batch, edge_index,
                               edge_attr, mode=MODE)
    out_pos = jax.block_until_ready(out_pos)
    assert out_pos.shape == (N, 3) and out_pos.dtype == jnp.float32
    assert bool(jnp.all(jnp.isfinite(out_pos)))
    print("KERNEL_OK")
</pallas_src>

<mosaic_0001>
module attributes {stable_mosaic.version = 11 : i64} {
  func.func @kernel(%arg0: i32, %arg1: memref<16x32xf32, #tpu.memory_space<vmem>>, %arg2: memref<16x3xf32, #tpu.memory_space<vmem>>, %arg3: memref<1x16x16xbf16, #tpu.memory_space<vmem>>, %arg4: memref<1x32x35xbf16, #tpu.memory_space<vmem>>, %arg5: memref<1x1x35xf32, #tpu.memory_space<vmem>>, %arg6: memref<1x1x32xf32, #tpu.memory_space<vmem>>, %arg7: memref<32x128xbf16, #tpu.memory_space<vmem>>, %arg8: memref<1x128xf32, #tpu.memory_space<vmem>>, %arg9: memref<160x32xbf16, #tpu.memory_space<vmem>>, %arg10: memref<1x32xf32, #tpu.memory_space<vmem>>, %arg11: memref<32x32xbf16, #tpu.memory_space<vmem>>, %arg12: memref<1x32xf32, #tpu.memory_space<vmem>>, %arg13: memref<32x3xbf16, #tpu.memory_space<vmem>>, %arg14: memref<1x3xf32, #tpu.memory_space<vmem>>, %arg15: memref<16x3xf32, #tpu.memory_space<vmem>>, %arg16: memref<16x32xf32, #tpu.memory_space<vmem>>) attributes {dimension_semantics = [#tpu.dimension_semantics<arbitrary>], iteration_bounds = array<i64: 2>, scalar_prefetch = 0 : i64, scratch_operands = 1 : i64, tpu.core_type = #tpu.core_type<tc>, window_params = [{pipeline_mode = #tpu.pipeline_mode<synchronous>, transform_indices = @transform_0, window_bounds = array<i64: 16, 32>}, {pipeline_mode = #tpu.pipeline_mode<synchronous>, transform_indices = @transform_1, window_bounds = array<i64: 16, 3>}, {transform_indices = @transform_2, window_bounds = array<i64: 1, 16, 16>}, {transform_indices = @transform_3, window_bounds = array<i64: 1, 32, 35>}, {transform_indices = @transform_4, window_bounds = array<i64: 1, 1, 35>}, {transform_indices = @transform_5, window_bounds = array<i64: 1, 1, 32>}, {pipeline_mode = #tpu.pipeline_mode<synchronous>, transform_indices = @transform_6, window_bounds = array<i64: 32, 128>}, {pipeline_mode = #tpu.pipeline_mode<synchronous>, transform_indices = @transform_7, window_bounds = array<i64: 1, 128>}, {pipeline_mode = #tpu.pipeline_mode<synchronous>, transform_indices = @transform_8, window_bounds = array<i64: 160, 32>}, {pipeline_mode = #tpu.pipeline_mode<synchronous>, transform_indices = @transform_9, window_bounds = array<i64: 1, 32>}, {pipeline_mode = #tpu.pipeline_mode<synchronous>, transform_indices = @transform_10, window_bounds = array<i64: 32, 32>}, {pipeline_mode = #tpu.pipeline_mode<synchronous>, transform_indices = @transform_11, window_bounds = array<i64: 1, 32>}, {pipeline_mode = #tpu.pipeline_mode<synchronous>, transform_indices = @transform_12, window_bounds = array<i64: 32, 3>}, {pipeline_mode = #tpu.pipeline_mode<synchronous>, transform_indices = @transform_13, window_bounds = array<i64: 1, 3>}, {pipeline_mode = #tpu.pipeline_mode<synchronous>, transform_indices = @transform_14, window_bounds = array<i64: 16, 3>}]} {
    %c0_i32 = arith.constant 0 : i32
    %0 = arith.cmpi eq, %arg0, %c0_i32 : i32
    %1 = arith.extui %0 : i1 to i32
    %c0_i32_0 = arith.constant 0 : i32
    %2 = arith.cmpi ne, %1, %c0_i32_0 : i32
    scf.if %2 {
      %c0_24 = arith.constant 0 : index
      %c0_25 = arith.constant 0 : index
      %48 = vector.load %arg1[%c0_24, %c0_25] : memref<16x32xf32, #tpu.memory_space<vmem>>, vector<16x32xf32>
      %c0_26 = arith.constant 0 : index
      %c0_27 = arith.constant 0 : index
      %49 = vector.load %arg16[%c0_26, %c0_27] : memref<16x32xf32, #tpu.memory_space<vmem>>, vector<16x32xf32>
      tpu.vector_store %arg16[%c0_26, %c0_27], %48 {strides = array<i32>} : memref<16x32xf32, #tpu.memory_space<vmem>>, vector<16x32xf32>,
    } else {
    }
    %c0 = arith.constant 0 : index
    %c0_1 = arith.constant 0 : index
    %3 = vector.load %arg16[%c0, %c0_1] : memref<16x32xf32, #tpu.memory_space<vmem>>, vector<16x32xf32>
    %4 = arith.truncf %3 : vector<16x32xf32> to vector<16x32xbf16>
    %c0_2 = arith.constant 0 : index
    %c0_3 = arith.constant 0 : index
    %c0_4 = arith.constant 0 : index
    %5 = vector.load %arg4[%c0_2, %c0_3, %c0_4] : memref<1x32x35xbf16, #tpu.memory_space<vmem>>, vector<1x32x35xbf16>
    %6 = vector.shape_cast %5 : vector<1x32x35xbf16> to vector<32x35xbf16>
    %cst = arith.constant dense<0.000000e+00> : vector<16x35xf32>
    %7 = tpu.matmul %4, %6, %cst {dimension_numbers = #tpu.dot_dimension_numbers<[1], [0], [0], [1], [0, 0, 1, 1], [], []>} : vector<16x32xbf16>, vector<32x35xbf16>, vector<16x35xf32> -> vector<16x35xf32>
    %c0_5 = arith.constant 0 : index
    %c0_6 = arith.constant 0 : index
    %c0_7 = arith.constant 0 : index
    %8 = vector.load %arg5[%c0_5, %c0_6, %c0_7] : memref<1x1x35xf32, #tpu.memory_space<vmem>>, vector<1x1x35xf32>
    %9 = vector.shape_cast %8 : vector<1x1x35xf32> to vector<1x35xf32>
    %10 = vector.broadcast %9 : vector<1x35xf32> to vector<16x35xf32>
    %11 = arith.addf %7, %10 : vector<16x35xf32>
    %12 = vector.extract_strided_slice %11 {offsets = [0, 0], sizes = [16, 32], strides = [1, 1]} : vector<16x35xf32> to vector<16x32xf32>
    %13 = vector.extract_strided_slice %11 {offsets = [0, 32], sizes = [16, 2], strides = [1, 1]} : vector<16x35xf32> to vector<16x2xf32>
    %14 = vector.extract_strided_slice %11 {offsets = [0, 33], sizes = [16, 2], strides = [1, 1]} : vector<16x35xf32> to vector<16x2xf32>
    %cst_8 = arith.constant dense<0.000000e+00> : vector<16x16xf32>
    %15 = tpu.matmul %13, %14, %cst_8 {dimension_numbers = #tpu.dot_dimension_numbers<[1], [1], [0], [0], [0, 0, 1, 0], [], []>} : vector<16x2xf32>, vector<16x2xf32>, vector<16x16xf32> -> vector<16x16xf32>
    %c0_9 = arith.constant 0 : index
    %c0_10 = arith.constant 0 : index
    %c0_11 = arith.constant 0 : index
    %16 = vector.load %arg3[%c0_9, %c0_10, %c0_11] : memref<1x16x16xbf16, #tpu.memory_space<vmem>>, vector<1x16x16xbf16>
    %17 = vector.shape_cast %16 : vector<1x16x16xbf16> to vector<16x16xbf16>
    %18 = arith.extf %17 : vector<16x16xbf16> to vector<16x16xf32>
    %19 = arith.addf %15, %18 : vector<16x16xf32>
    %cst_12 = arith.constant 0.000000e+00 : f32
    %20 = vector.broadcast %cst_12 : f32 to vector<16x16xf32>
    %21 = arith.cmpf ogt, %19, %20 : vector<16x16xf32>
    %cst_13 = arith.constant 2.000000e-01 : f32
    %22 = vector.broadcast %cst_13 : f32 to vector<16x16xf32>
    %23 = arith.mulf %22, %19 : vector<16x16xf32>
    %24 = arith.select %21, %19, %23 : vector<16x16xi1>, vector<16x16xf32>
    %cst_14 = arith.constant dense<0xFF800000> : vector<16xf32>
    %25 = vector.multi_reduction <maximumf>, %24, %cst_14 [1] : vector<16x16xf32> to vector<16xf32>
    %26 = vector.shape_cast %25 : vector<16xf32> to vector<16x1xf32>
    %27 = vector.broadcast %26 : vector<16x1xf32> to vector<16x16xf32>
    %28 = arith.subf %24, %27 : vector<16x16xf32>
    %29 = math.exp %28 : vector<16x16xf32>
    %cst_15 = arith.constant dense<0.000000e+00> : vector<16xf32>
    %30 = vector.multi_reduction <add>, %29, %cst_15 [1] : vector<16x16xf32> to vector<16xf32>
    %31 = vector.shape_cast %30 : vector<16xf32> to vector<16x1xf32>
    %32 = arith.truncf %29 : vector<16x16xf32> to vector<16x16xbf16>
    %33 = arith.truncf %12 : vector<16x32xf32> to vector<16x32xbf16>
    %cst_16 = arith.constant dense<0.000000e+00> : vector<16x32xf32>
    %34 = tpu.matmul %32, %33, %cst_16 {dimension_numbers = #tpu.dot_dimension_numbers<[1], [0], [0], [1], [0, 0, 1, 1], [], []>} : vector<16x16xbf16>, vector<16x32xbf16>, vector<16x32xf32> -> vector<16x32xf32>
    %35 = tpu.reciprocal %31 {approx = true} : vector<16x1xf32> -> vector<16x1xf32>
    %36 = vector.broadcast %35 : vector<16x1xf32> to vector<16x32xf32>
    %37 = arith.mulf %34, %36 : vector<16x32xf32>
    %c0_17 = arith.constant 0 : index
    %c0_18 = arith.constant 0 : index
    %c0_19 = arith.constant 0 : index
    %38 = vector.load %arg6[%c0_17, %c0_18, %c0_19] : memref<1x1x32xf32, #tpu.memory_space<vmem>>, vector<1x1x32xf32>
    %39 = vector.shape_cast %38 : vector<1x1x32xf32> to vector<1x32xf32>
    %40 = vector.broadcast %39 : vector<1x32xf32> to vector<16x32xf32>
    %41 = arith.addf %37, %40 : vector<16x32xf32>
    %cst_20 = arith.constant 0.000000e+00 : f32
    %42 = vector.broadcast %cst_20 : f32 to vector<16x32xf32>
    %43 = arith.maximumf %41, %42 : vector<16x32xf32>
    %c0_21 = arith.constant 0 : index
    %c0_22 = arith.constant 0 : index
    %44 = vector.load %arg16[%c0_21, %c0_22] : memref<16x32xf32, #tpu.memory_space<vmem>>, vector<16x32xf32>
    tpu.vector_store %arg16[%c0_21, %c0_22], %43 {strides = array<i32>} : memref<16x32xf32, #tpu.memory_space<vmem>>, vector<16x32xf32>,
    %c1_i32 = arith.constant 1 : i32
    %45 = arith.cmpi eq, %arg0, %c1_i32 : i32
    %46 = arith.extui %45 : i1 to i32
    %c0_i32_23 = arith.constant 0 : i32
    %47 = arith.cmpi ne, %46, %c0_i32_23 : i32
    scf.if %47 {
      %48 = arith.truncf %43 : vector<16x32xf32> to vector<16x32xbf16>
      %c0_24 = arith.constant 0 : index
      %c0_25 = arith.constant 0 : index
      %49 = vector.load %arg7[%c0_24, %c0_25] : memref<32x128xbf16, #tpu.memory_space<vmem>>, vector<32x128xbf16>
      %cst_26 = arith.constant dense<0.000000e+00> : vector<16x128xf32>
      %50 = tpu.matmul %48, %49, %cst_26 {dimension_numbers = #tpu.dot_dimension_numbers<[1], [0], [0], [1], [0, 0, 1, 1], [], []>} : vector<16x32xbf16>, vector<32x128xbf16>, vector<16x128xf32> -> vector<16x128xf32>
      %c0_27 = arith.constant 0 : index
      %c0_28 = arith.constant 0 : index
      %51 = vector.load %arg8[%c0_27, %c0_28] : memref<1x128xf32, #tpu.memory_space<vmem>>, vector<1x128xf32>
      %52 = vector.broadcast %51 : vector<1x128xf32> to vector<16x128xf32>
      %53 = arith.addf %50, %52 : vector<16x128xf32>
      %54 = vector.extract_strided_slice %53 {offsets = [0, 0], sizes = [16, 32], strides = [1, 1]} : vector<16x128xf32> to vector<16x32xf32>
      %55 = arith.truncf %54 : vector<16x32xf32> to vector<16x32xbf16>
      %cst_29 = arith.constant dense<0.000000e+00> : vector<16x16xf32>
      %56 = tpu.matmul %55, %55, %cst_29 {dimension_numbers = #tpu.dot_dimension_numbers<[1], [1], [0], [0], [0, 0, 1, 0], [], []>} : vector<16x32xbf16>, vector<16x32xbf16>, vector<16x16xf32> -> vector<16x16xf32>
      %cst_30 = arith.constant dense<0xFF800000> : vector<16xf32>
      %57 = vector.multi_reduction <maximumf>, %56, %cst_30 [1] : vector<16x16xf32> to vector<16xf32>
      %58 = vector.shape_cast %57 : vector<16xf32> to vector<16x1xf32>
      %59 = vector.broadcast %58 : vector<16x1xf32> to vector<16x16xf32>
      %60 = arith.subf %56, %59 : vector<16x16xf32>
      %61 = math.exp %60 : vector<16x16xf32>
      %cst_31 = arith.constant dense<0.000000e+00> : vector<16xf32>
      %62 = vector.multi_reduction <add>, %61, %cst_31 [1] : vector<16x16xf32> to vector<16xf32>
      %63 = vector.shape_cast %62 : vector<16xf32> to vector<16x1xf32>
      %64 = arith.truncf %61 : vector<16x16xf32> to vector<16x16xbf16>
      %cst_32 = arith.constant dense<0.000000e+00> : vector<16x32xf32>
      %65 = tpu.matmul %64, %48, %cst_32 {dimension_numbers = #tpu.dot_dimension_numbers<[1], [0], [0], [1], [0, 0, 1, 1], [], []>} : vector<16x16xbf16>, vector<16x32xbf16>, vector<16x32xf32> -> vector<16x32xf32>
      %66 = tpu.reciprocal %63 {approx = true} : vector<16x1xf32> -> vector<16x1xf32>
      %67 = vector.broadcast %66 : vector<16x1xf32> to vector<16x32xf32>
      %68 = arith.mulf %65, %67 : vector<16x32xf32>
      %69 = vector.extract_strided_slice %53 {offsets = [0, 32], sizes = [16, 32], strides = [1, 1]} : vector<16x128xf32> to vector<16x32xf32>
      %70 = arith.truncf %69 : vector<16x32xf32> to vector<16x32xbf16>
      %cst_33 = arith.constant dense<0.000000e+00> : vector<16x16xf32>
      %71 = tpu.matmul %70, %70, %cst_33 {dimension_numbers = #tpu.dot_dimension_numbers<[1], [1], [0], [0], [0, 0, 1, 0], [], []>} : vector<16x32xbf16>, vector<16x32xbf16>, vector<16x16xf32> -> vector<16x16xf32>
      %cst_34 = arith.constant dense<0xFF800000> : vector<16xf32>
      %72 = vector.multi_reduction <maximumf>, %71, %cst_34 [1] : vector<16x16xf32> to vector<16xf32>
      %73 = vector.shape_cast %72 : vector<16xf32> to vector<16x1xf32>
      %74 = vector.broadcast %73 : vector<16x1xf32> to vector<16x16xf32>
      %75 = arith.subf %71, %74 : vector<16x16xf32>
      %76 = math.exp %75 : vector<16x16xf32>
      %cst_35 = arith.constant dense<0.000000e+00> : vector<16xf32>
      %77 = vector.multi_reduction <add>, %76, %cst_35 [1] : vector<16x16xf32> to vector<16xf32>
      %78 = vector.shape_cast %77 : vector<16xf32> to vector<16x1xf32>
      %79 = arith.truncf %76 : vector<16x16xf32> to vector<16x16xbf16>
      %cst_36 = arith.constant dense<0.000000e+00> : vector<16x32xf32>
      %80 = tpu.matmul %79, %48, %cst_36 {dimension_numbers = #tpu.dot_dimension_numbers<[1], [0], [0], [1], [0, 0, 1, 1], [], []>} : vector<16x16xbf16>, vector<16x32xbf16>, vector<16x32xf32> -> vector<16x32xf32>
      %81 = tpu.reciprocal %78 {approx = true} : vector<16x1xf32> -> vector<16x1xf32>
      %82 = vector.broadcast %81 : vector<16x1xf32> to vector<16x32xf32>
      %83 = arith.mulf %80, %82 : vector<16x32xf32>
      %84 = vector.extract_strided_slice %53 {offsets = [0, 64], sizes = [16, 32], strides = [1, 1]} : vector<16x128xf32> to vector<16x32xf32>
      %85 = arith.truncf %84 : vector<16x32xf32> to vector<16x32xbf16>
      %cst_37 = arith.constant dense<0.000000e+00> : vector<16x16xf32>
      %86 = tpu.matmul %85, %85, %cst_37 {dimension_numbers = #tpu.dot_dimension_numbers<[1], [1], [0], [0], [0, 0, 1, 0], [], []>} : vector<16x32xbf16>, vector<16x32xbf16>, vector<16x16xf32> -> vector<16x16xf32>
      %cst_38 = arith.constant dense<0xFF800000> : vector<16xf32>
      %87 = vector.multi_reduction <maximumf>, %86, %cst_38 [1] : vector<16x16xf32> to vector<16xf32>
      %88 = vector.shape_cast %87 : vector<16xf32> to vector<16x1xf32>
      %89 = vector.broadcast %88 : vector<16x1xf32> to vector<16x16xf32>
      %90 = arith.subf %86, %89 : vector<16x16xf32>
      %91 = math.exp %90 : vector<16x16xf32>
      %cst_39 = arith.constant dense<0.000000e+00> : vector<16xf32>
      %92 = vector.multi_reduction <add>, %91, %cst_39 [1] : vector<16x16xf32> to vector<16xf32>
      %93 = vector.shape_cast %92 : vector<16xf32> to vector<16x1xf32>
      %94 = arith.truncf %91 : vector<16x16xf32> to vector<16x16xbf16>
      %cst_40 = arith.constant dense<0.000000e+00> : vector<16x32xf32>
      %95 = tpu.matmul %94, %48, %cst_40 {dimension_numbers = #tpu.dot_dimension_numbers<[1], [0], [0], [1], [0, 0, 1, 1], [], []>} : vector<16x16xbf16>, vector<16x32xbf16>, vector<16x32xf32> -> vector<16x32xf32>
      %96 = tpu.reciprocal %93 {approx = true} : vector<16x1xf32> -> vector<16x1xf32>
      %97 = vector.broadcast %96 : vector<16x1xf32> to vector<16x32xf32>
      %98 = arith.mulf %95, %97 : vector<16x32xf32>
      %99 = vector.extract_strided_slice %53 {offsets = [0, 96], sizes = [16, 32], strides = [1, 1]} : vector<16x128xf32> to vector<16x32xf32>
      %100 = arith.truncf %99 : vector<16x32xf32> to vector<16x32xbf16>
      %cst_41 = arith.constant dense<0.000000e+00> : vector<16x16xf32>
      %101 = tpu.matmul %100, %100, %cst_41 {dimension_numbers = #tpu.dot_dimension_numbers<[1], [1], [0], [0], [0, 0, 1, 0], [], []>} : vector<16x32xbf16>, vector<16x32xbf16>, vector<16x16xf32> -> vector<16x16xf32>
      %cst_42 = arith.constant dense<0xFF800000> : vector<16xf32>
      %102 = vector.multi_reduction <maximumf>, %101, %cst_42 [1] : vector<16x16xf32> to vector<16xf32>
      %103 = vector.shape_cast %102 : vector<16xf32> to vector<16x1xf32>
      %104 = vector.broadcast %103 : vector<16x1xf32> to vector<16x16xf32>
      %105 = arith.subf %101, %104 : vector<16x16xf32>
      %106 = math.exp %105 : vector<16x16xf32>
      %cst_43 = arith.constant dense<0.000000e+00> : vector<16xf32>
      %107 = vector.multi_reduction <add>, %106, %cst_43 [1] : vector<16x16xf32> to vector<16xf32>
      %108 = vector.shape_cast %107 : vector<16xf32> to vector<16x1xf32>
      %109 = arith.truncf %106 : vector<16x16xf32> to vector<16x16xbf16>
      %cst_44 = arith.constant dense<0.000000e+00> : vector<16x32xf32>
      %110 = tpu.matmul %109, %48, %cst_44 {dimension_numbers = #tpu.dot_dimension_numbers<[1], [0], [0], [1], [0, 0, 1, 1], [], []>} : vector<16x16xbf16>, vector<16x32xbf16>, vector<16x32xf32> -> vector<16x32xf32>
      %111 = tpu.reciprocal %108 {approx = true} : vector<16x1xf32> -> vector<16x1xf32>
      %112 = vector.broadcast %111 : vector<16x1xf32> to vector<16x32xf32>
      %113 = arith.mulf %110, %112 : vector<16x32xf32>
      %c0_45 = arith.constant 0 : index
      %c0_46 = arith.constant 0 : index
      %114 = vector.load %arg9[%c0_45, %c0_46] : memref<160x32xbf16, #tpu.memory_space<vmem>>, vector<160x32xbf16>
      %115 = arith.truncf %43 : vector<16x32xf32> to vector<16x32xbf16>
      %116 = vector.extract_strided_slice %114 {offsets = [0, 0], sizes = [32, 32], strides = [1, 1]} : vector<160x32xbf16> to vector<32x32xbf16>
      %cst_47 = arith.constant dense<0.000000e+00> : vector<16x32xf32>
      %117 = tpu.matmul %115, %116, %cst_47 {dimension_numbers = #tpu.dot_dimension_numbers<[1], [0], [0], [1], [0, 0, 1, 1], [], []>} : vector<16x32xbf16>, vector<32x32xbf16>, vector<16x32xf32> -> vector<16x32xf32>
      %c0_48 = arith.constant 0 : index
      %c0_49 = arith.constant 0 : index
      %118 = vector.load %arg10[%c0_48, %c0_49] : memref<1x32xf32, #tpu.memory_space<vmem>>, vector<1x32xf32>
      %119 = vector.broadcast %118 : vector<1x32xf32> to vector<16x32xf32>
      %120 = arith.addf %117, %119 : vector<16x32xf32>
      %121 = arith.truncf %68 : vector<16x32xf32> to vector<16x32xbf16>
      %122 = vector.extract_strided_slice %114 {offsets = [32, 0], sizes = [32, 32], strides = [1, 1]} : vector<160x32xbf16> to vector<32x32xbf16>
      %cst_50 = arith.constant dense<0.000000e+00> : vector<16x32xf32>
      %123 = tpu.matmul %121, %122, %cst_50 {dimension_numbers = #tpu.dot_dimension_numbers<[1], [0], [0], [1], [0, 0, 1, 1], [], []>} : vector<16x32xbf16>, vector<32x32xbf16>, vector<16x32xf32> -> vector<16x32xf32>
      %124 = arith.addf %120, %123 : vector<16x32xf32>
      %125 = arith.truncf %83 : vector<16x32xf32> to vector<16x32xbf16>
      %126 = vector.extract_strided_slice %114 {offsets = [64, 0], sizes = [32, 32], strides = [1, 1]} : vector<160x32xbf16> to vector<32x32xbf16>
      %cst_51 = arith.constant dense<0.000000e+00> : vector<16x32xf32>
      %127 = tpu.matmul %125, %126, %cst_51 {dimension_numbers = #tpu.dot_dimension_numbers<[1], [0], [0], [1], [0, 0, 1, 1], [], []>} : vector<16x32xbf16>, vector<32x32xbf16>, vector<16x32xf32> -> vector<16x32xf32>
      %128 = arith.addf %124, %127 : vector<16x32xf32>
      %129 = arith.truncf %98 : vector<16x32xf32> to vector<16x32xbf16>
      %130 = vector.extract_strided_slice %114 {offsets = [96, 0], sizes = [32, 32], strides = [1, 1]} : vector<160x32xbf16> to vector<32x32xbf16>
      %cst_52 = arith.constant dense<0.000000e+00> : vector<16x32xf32>
      %131 = tpu.matmul %129, %130, %cst_52 {dimension_numbers = #tpu.dot_dimension_numbers<[1], [0], [0], [1], [0, 0, 1, 1], [], []>} : vector<16x32xbf16>, vector<32x32xbf16>, vector<16x32xf32> -> vector<16x32xf32>
      %132 = arith.addf %128, %131 : vector<16x32xf32>
      %133 = arith.truncf %113 : vector<16x32xf32> to vector<16x32xbf16>
      %134 = vector.extract_strided_slice %114 {offsets = [128, 0], sizes = [32, 32], strides = [1, 1]} : vector<160x32xbf16> to vector<32x32xbf16>
      %cst_53 = arith.constant dense<0.000000e+00> : vector<16x32xf32>
      %135 = tpu.matmul %133, %134, %cst_53 {dimension_numbers = #tpu.dot_dimension_numbers<[1], [0], [0], [1], [0, 0, 1, 1], [], []>} : vector<16x32xbf16>, vector<32x32xbf16>, vector<16x32xf32> -> vector<16x32xf32>
      %136 = arith.addf %132, %135 : vector<16x32xf32>
      %cst_54 = arith.constant 0.000000e+00 : f32
      %137 = vector.broadcast %cst_54 : f32 to vector<16x32xf32>
      %138 = arith.maximumf %136, %137 : vector<16x32xf32>
      %139 = arith.truncf %138 : vector<16x32xf32> to vector<16x32xbf16>
      %c0_55 = arith.constant 0 : index
      %c0_56 = arith.constant 0 : index
      %140 = vector.load %arg11[%c0_55, %c0_56] : memref<32x32xbf16, #tpu.memory_space<vmem>>, vector<32x32xbf16>
      %cst_57 = arith.constant dense<0.000000e+00> : vector<16x32xf32>
      %141 = tpu.matmul %139, %140, %cst_57 {dimension_numbers = #tpu.dot_dimension_numbers<[1], [0], [0], [1], [0, 0, 1, 1], [], []>} : vector<16x32xbf16>, vector<32x32xbf16>, vector<16x32xf32> -> vector<16x32xf32>
      %c0_58 = arith.constant 0 : index
      %c0_59 = arith.constant 0 : index
      %142 = vector.load %arg12[%c0_58, %c0_59] : memref<1x32xf32, #tpu.memory_space<vmem>>, vector<1x32xf32>
      %143 = vector.broadcast %142 : vector<1x32xf32> to vector<16x32xf32>
      %144 = arith.addf %141, %143 : vector<16x32xf32>
      %cst_60 = arith.constant 0.000000e+00 : f32
      %145 = vector.broadcast %cst_60 : f32 to vector<16x32xf32>
      %146 = arith.maximumf %144, %145 : vector<16x32xf32>
      %147 = arith.truncf %146 : vector<16x32xf32> to vector<16x32xbf16>
      %c0_61 = arith.constant 0 : index
      %c0_62 = arith.constant 0 : index
      %148 = vector.load %arg13[%c0_61, %c0_62] : memref<32x3xbf16, #tpu.memory_space<vmem>>, vector<32x3xbf16>
      %cst_63 = arith.constant dense<0.000000e+00> : vector<16x3xf32>
      %149 = tpu.matmul %147, %148, %cst_63 {dimension_numbers = #tpu.dot_dimension_numbers<[1], [0], [0], [1], [0, 0, 1, 1], [], []>} : vector<16x32xbf16>, vector<32x3xbf16>, vector<16x3xf32> -> vector<16x3xf32>
      %c0_64 = arith.constant 0 : index
      %c0_65 = arith.constant 0 : index
      %150 = vector.load %arg14[%c0_64, %c0_65] : memref<1x3xf32, #tpu.memory_space<vmem>>, vector<1x3xf32>
      %151 = vector.broadcast %150 : vector<1x3xf32> to vector<16x3xf32>
      %152 = arith.addf %149, %151 : vector<16x3xf32>
      %c0_66 = arith.constant 0 : index
      %c0_67 = arith.constant 0 : index
      %153 = vector.load %arg2[%c0_66, %c0_67] : memref<16x3xf32, #tpu.memory_space<vmem>>, vector<16x3xf32>
      %154 = arith.addf %153, %152 : vector<16x3xf32>
      %c0_68 = arith.constant 0 : index
      %c0_69 = arith.constant 0 : index
      %155 = vector.load %arg15[%c0_68, %c0_69] : memref<16x3xf32, #tpu.memory_space<vmem>>, vector<16x3xf32>
      tpu.vector_store %arg15[%c0_68, %c0_69], %154 {strides = array<i32>} : memref<16x3xf32, #tpu.memory_space<vmem>>, vector<16x3xf32>,
    } else {
    }
    return
  }
  func.func @transform_0(%arg0: i32) -> (i32, i32) {
    %c0_i32 = arith.constant 0 : i32
    %c0_i32_0 = arith.constant 0 : i32
    %c0_i32_1 = arith.constant 0 : i32
    return %c0_i32, %c0_i32_0 : i32, i32
  }
  func.func @transform_1(%arg0: i32) -> (i32, i32) {
    %c0_i32 = arith.constant 0 : i32
    %c0_i32_0 = arith.constant 0 : i32
    %c0_i32_1 = arith.constant 0 : i32
    return %c0_i32, %c0_i32_0 : i32, i32
  }
  func.func @transform_2(%arg0: i32) -> (i32, i32, i32) {
    %c0_i32 = arith.constant 0 : i32
    %c0_i32_0 = arith.constant 0 : i32
    %c0_i32_1 = arith.constant 0 : i32
    return %arg0, %c0_i32, %c0_i32_0 : i32, i32, i32
  }
  func.func @transform_3(%arg0: i32) -> (i32, i32, i32) {
    %c0_i32 = arith.constant 0 : i32
    %c0_i32_0 = arith.constant 0 : i32
    %c0_i32_1 = arith.constant 0 : i32
    return %arg0, %c0_i32, %c0_i32_0 : i32, i32, i32
  }
  func.func @transform_4(%arg0: i32) -> (i32, i32, i32) {
    %c0_i32 = arith.constant 0 : i32
    %c0_i32_0 = arith.constant 0 : i32
    %c0_i32_1 = arith.constant 0 : i32
    return %arg0, %c0_i32, %c0_i32_0 : i32, i32, i32
  }
  func.func @transform_5(%arg0: i32) -> (i32, i32, i32) {
    %c0_i32 = arith.constant 0 : i32
    %c0_i32_0 = arith.constant 0 : i32
    %c0_i32_1 = arith.constant 0 : i32
    return %arg0, %c0_i32, %c0_i32_0 : i32, i32, i32
  }
  func.func @transform_6(%arg0: i32) -> (i32, i32) {
    %c0_i32 = arith.constant 0 : i32
    %c0_i32_0 = arith.constant 0 : i32
    %c0_i32_1 = arith.constant 0 : i32
    return %c0_i32, %c0_i32_0 : i32, i32
  }
  func.func @transform_7(%arg0: i32) -> (i32, i32) {
    %c0_i32 = arith.constant 0 : i32
    %c0_i32_0 = arith.constant 0 : i32
    %c0_i32_1 = arith.constant 0 : i32
    return %c0_i32, %c0_i32_0 : i32, i32
  }
  func.func @transform_8(%arg0: i32) -> (i32, i32) {
    %c0_i32 = arith.constant 0 : i32
    %c0_i32_0 = arith.constant 0 : i32
    %c0_i32_1 = arith.constant 0 : i32
    return %c0_i32, %c0_i32_0 : i32, i32
  }
  func.func @transform_9(%arg0: i32) -> (i32, i32) {
    %c0_i32 = arith.constant 0 : i32
    %c0_i32_0 = arith.constant 0 : i32
    %c0_i32_1 = arith.constant 0 : i32
    return %c0_i32, %c0_i32_0 : i32, i32
  }
  func.func @transform_10(%arg0: i32) -> (i32, i32) {
    %c0_i32 = arith.constant 0 : i32
    %c0_i32_0 = arith.constant 0 : i32
    %c0_i32_1 = arith.constant 0 : i32
    return %c0_i32, %c0_i32_0 : i32, i32
  }
  func.func @transform_11(%arg0: i32) -> (i32, i32) {
    %c0_i32 = arith.constant 0 : i32
    %c0_i32_0 = arith.constant 0 : i32
    %c0_i32_1 = arith.constant 0 : i32
    return %c0_i32, %c0_i32_0 : i32, i32
  }
  func.func @transform_12(%arg0: i32) -> (i32, i32) {
    %c0_i32 = arith.constant 0 : i32
    %c0_i32_0 = arith.constant 0 : i32
    %c0_i32_1 = arith.constant 0 : i32
    return %c0_i32, %c0_i32_0 : i32, i32
  }
  func.func @transform_13(%arg0: i32) -> (i32, i32) {
    %c0_i32 = arith.constant 0 : i32
    %c0_i32_0 = arith.constant 0 : i32
    %c0_i32_1 = arith.constant 0 : i32
    return %c0_i32, %c0_i32_0 : i32, i32
  }
  func.func @transform_14(%arg0: i32) -> (i32, i32) {
    %c0_i32 = arith.constant 0 : i32
    %c0_i32_0 = arith.constant 0 : i32
    %c0_i32_1 = arith.constant 0 : i32
    return %c0_i32, %c0_i32_0 : i32, i32
  }
}

</mosaic_0001>

<llo_original>
// kernel: tpu_custom_call.1
$region0: #{tpu_custom_call.1}
  #allocation0 [shape = 'u32[]', space=smem, size = 0x4, offset = 0x4, fixed_abs, tag = 'smem constant byte address 0x4 - core index']
  #allocation1 [shape = 'u32[144,128]{1,0:T(1,128)}', space=vmem, size = 0x12000, scoped, tag = 'internal scratch']
  #allocation2 [shape = 'f32[16,32]{1,0:T(8,128)}', space=vmem, size = 0x2000, scoped, tag = 'scratch operand']
  %s0 = inlined_call_operand.vmem [shape: f32[16,32], index: 0, kind: input, shape index: {}]
  %s1 = inlined_call_operand.vmem [shape: f32[16,3], index: 1, kind: input, shape index: {}]
  %s2 = inlined_call_operand.vmem [shape: bf16[2,16,16], index: 2, kind: input, shape index: {}]
  %s3 = inlined_call_operand.vmem [shape: bf16[2,32,35], index: 3, kind: input, shape index: {}]
  %s4 = inlined_call_operand.vmem [shape: f32[2,1,35], index: 4, kind: input, shape index: {}]
  %s5 = inlined_call_operand.vmem [shape: f32[2,1,32], index: 5, kind: input, shape index: {}]
  %s6 = inlined_call_operand.vmem [shape: bf16[32,128], index: 6, kind: input, shape index: {}]
  %s7 = inlined_call_operand.vmem [shape: f32[1,128], index: 7, kind: input, shape index: {}]
  %s8 = inlined_call_operand.vmem [shape: bf16[160,32], index: 8, kind: input, shape index: {}]
  %s9 = inlined_call_operand.vmem [shape: f32[1,32], index: 9, kind: input, shape index: {}]
  %s10 = inlined_call_operand.vmem [shape: bf16[32,32], index: 10, kind: input, shape index: {}]
  %s11 = inlined_call_operand.vmem [shape: f32[1,32], index: 11, kind: input, shape index: {}]
  %s12 = inlined_call_operand.vmem [shape: bf16[32,3], index: 12, kind: input, shape index: {}]
  %s13 = inlined_call_operand.vmem [shape: f32[1,3], index: 13, kind: input, shape index: {}]
  %s14 = inlined_call_operand.vmem [shape: f32[16,3], index: 14, kind: output, shape index: {}]
  %s15 = sld [smem:[#allocation0]]
  $region97: #{tpu_custom_call.1} parent=0
    _
  %s17 = ssub.s32 1, %s15
  %s18 = scalar_select 0, %s17, %s15
  loop: start=0, step=1, limit=4
  $region2: #{tpu_custom_call.1} parent=0 // loop_pre_header
    _
  $region3: #{tpu_custom_call.1} parent=0 // loop_header
    %s20 = sphi 0, %s24
    %p21 = scmp.ge.s32.totalorder %s20, 4
    %s28 = sphi 0, %s28
    %s30 = sphi 0, %s28
    %s31 = sphi 0, %s30
    %s45 = sphi 0, %s31
    %s49 = sphi 0, %s49
    %s51 = sphi 0, %s49
    %s52 = sphi 0, %s51
    %s66 = sphi 0, %s52
    %s72 = sphi 0, %s74
    %s75 = sphi 0, %s72
    %s76 = sphi 0, %s75
    %s92 = sphi 0, %s76
    %s98 = sphi 0, %s100
    %s101 = sphi 0, %s98
    %s102 = sphi 0, %s101
    %s118 = sphi 0, %s102
    %s124 = sphi 0, %s126
    %s127 = sphi 0, %s124
    %s128 = sphi 0, %s127
    %s144 = sphi 0, %s128
    %s150 = sphi 0, %s152
    %s153 = sphi 0, %s150
    %s154 = sphi 0, %s153
    %s170 = sphi 0, %s154
    %s174 = sphi 0, %s174
    %s176 = sphi 0, %s174
    %s177 = sphi 0, %s176
    %s191 = sphi 0, %s177
    %s195 = sphi 0, %s195
    %s197 = sphi 0, %s195
    %s198 = sphi 0, %s197
    %s212 = sphi 0, %s198
    %s216 = sphi 0, %s216
    %s218 = sphi 0, %s216
    %s219 = sphi 0, %s218
    %s233 = sphi 0, %s219
    %s237 = sphi 0, %s237
    %s239 = sphi 0, %s237
    %s240 = sphi 0, %s239
    %s254 = sphi 0, %s240
    %s258 = sphi 0, %s258
    %s260 = sphi 0, %s258
    %s261 = sphi 0, %s260
    %s275 = sphi 0, %s261
    %s279 = sphi 0, %s279
    %s281 = sphi 0, %s279
    %s282 = sphi 0, %s281
    %s296 = sphi 0, %s282
    %s300 = sphi 0, %s300
    %s302 = sphi 0, %s300
    %s303 = sphi 0, %s302
    %s317 = sphi 0, %s303
    %s321 = sphi 0, %s321
    %s323 = sphi 0, %s321
    %s324 = sphi 0, %s323
    %s338 = sphi 0, %s324
    %s342 = sphi 0, %s342
    %s344 = sphi 0, %s342
    %s345 = sphi 0, %s344
    %s359 = sphi 0, %s345
  $region4: #{tpu_custom_call.1} parent=0 // loop_header_branch
    %23 = sbr.rel (%p21) target = $region8
  $region5: #{tpu_custom_call.1} parent=0 // loop_body
    %s25 = ssub.s32 %s20, 1
    %s26 = ssub.s32 %s20, 2
    %s27 = sadd.s32 %s20, 1
    %s29 = sadd.s32 %s28, 1
    %p32 = scmp.eq.s32.totalorder %s20, 1
    %p33 = scmp.ne.s32.totalorder %s28, %s30
    %p34 = scmp.eq.s32.totalorder %s20, 0
    %p35 = por %p33, %p34
    %p36 = scmp.ne.s32.totalorder %s28, %s30
    %p37 = scmp.eq.s32.totalorder %s25, 1
    %p38 = por %p36, %p37
    %p39 = scmp.ne.s32.totalorder %s30, %s31
    %p40 = scmp.eq.s32.totalorder %s25, 0
    %p41 = por %p39, %p40
    %p42 = scmp.ne.s32.totalorder %s30, %s31
    %p43 = scmp.eq.s32.totalorder %s26, 1
    %p44 = por %p42, %p43
    %p46 = scmp.ne.s32.totalorder %s31, %s45
    %p47 = scmp.eq.s32.totalorder %s26, 0
    %p48 = por %p46, %p47
    %s50 = sadd.s32 %s49, 1
    %p53 = scmp.eq.s32.totalorder %s20, 1
    %p54 = scmp.ne.s32.totalorder %s49, %s51
    %p55 = scmp.eq.s32.totalorder %s20, 0
    %p56 = por %p54, %p55
    %p57 = scmp.ne.s32.totalorder %s49, %s51
    %p58 = scmp.eq.s32.totalorder %s25, 1
    %p59 = por %p57, %p58
    %p60 = scmp.ne.s32.totalorder %s51, %s52
    %p61 = scmp.eq.s32.totalorder %s25, 0
    %p62 = por %p60, %p61
    %p63 = scmp.ne.s32.totalorder %s51, %s52
    %p64 = scmp.eq.s32.totalorder %s26, 1
    %p65 = por %p63, %p64
    %p67 = scmp.ne.s32.totalorder %s52, %s66
    %p68 = scmp.eq.s32.totalorder %s26, 0
    %p69 = por %p67, %p68
    %s70 = ssub.s32 %s20, %s27
    %p71 = scmp.eq.s32.totalorder %s70, 0
    %s73 = sadd.s32 %s72, 1
    %s74 = scalar_select %p71, %s72, %s73
    %p77 = pneg %p71
    %p78 = scmp.eq.s32.totalorder %s20, 1
    %p79 = por %p77, %p78
    %p80 = scmp.ne.s32.totalorder %s72, %s75
    %p81 = scmp.eq.s32.totalorder %s20, 0
    %p82 = por %p80, %p81
    %p83 = scmp.ne.s32.totalorder %s72, %s75
    %p84 = scmp.eq.s32.totalorder %s25, 1
    %p85 = por %p83, %p84
    %p86 = scmp.ne.s32.totalorder %s75, %s76
    %p87 = scmp.eq.s32.totalorder %s25, 0
    %p88 = por %p86, %p87
    %p89 = scmp.ne.s32.totalorder %s75, %s76
    %p90 = scmp.eq.s32.totalorder %s26, 1
    %p91 = por %p89, %p90
    %p93 = scmp.ne.s32.totalorder %s76, %s92
    %p94 = scmp.eq.s32.totalorder %s26, 0
    %p95 = por %p93, %p94
    %s96 = ssub.s32 %s20, %s27
    %p97 = scmp.eq.s32.totalorder %s96, 0
    %s99 = sadd.s32 %s98, 1
    %s100 = scalar_select %p97, %s98, %s99
    %p103 = pneg %p97
    %p104 = scmp.eq.s32.totalorder %s20, 1
    %p105 = por %p103, %p104
    %p106 = scmp.ne.s32.totalorder %s98, %s101
    %p107 = scmp.eq.s32.totalorder %s20, 0
    %p108 = por %p106, %p107
    %p109 = scmp.ne.s32.totalorder %s98, %s101
    %p110 = scmp.eq.s32.totalorder %s25, 1
    %p111 = por %p109, %p110
    %p112 = scmp.ne.s32.totalorder %s101, %s102
    %p113 = scmp.eq.s32.totalorder %s25, 0
    %p114 = por %p112, %p113
    %p115 = scmp.ne.s32.totalorder %s101, %s102
    %p116 = scmp.eq.s32.totalorder %s26, 1
    %p117 = por %p115, %p116
    %p119 = scmp.ne.s32.totalorder %s102, %s118
    %p120 = scmp.eq.s32.totalorder %s26, 0
    %p121 = por %p119, %p120
    %s122 = ssub.s32 %s20, %s27
    %p123 = scmp.eq.s32.totalorder %s122, 0
    %s125 = sadd.s32 %s124, 1
    %s126 = scalar_select %p123, %s124, %s125
    %p129 = pneg %p123
    %p130 = scmp.eq.s32.totalorder %s20, 1
    %p131 = por %p129, %p130
    %p132 = scmp.ne.s32.totalorder %s124, %s127
    %p133 = scmp.eq.s32.totalorder %s20, 0
    %p134 = por %p132, %p133
    %p135 = scmp.ne.s32.totalorder %s124, %s127
    %p136 = scmp.eq.s32.totalorder %s25, 1
    %p137 = por %p135, %p136
    %p138 = scmp.ne.s32.totalorder %s127, %s128
    %p139 = scmp.eq.s32.totalorder %s25, 0
    %p140 = por %p138, %p139
    %p141 = scmp.ne.s32.totalorder %s127, %s128
    %p142 = scmp.eq.s32.totalorder %s26, 1
    %p143 = por %p141, %p142
    %p145 = scmp.ne.s32.totalorder %s128, %s144
    %p146 = scmp.eq.s32.totalorder %s26, 0
    %p147 = por %p145, %p146
    %s148 = ssub.s32 %s20, %s27
    %p149 = scmp.eq.s32.totalorder %s148, 0
    %s151 = sadd.s32 %s150, 1
    %s152 = scalar_select %p149, %s150, %s151
    %p155 = pneg %p149
    %p156 = scmp.eq.s32.totalorder %s20, 1
    %p157 = por %p155, %p156
    %p158 = scmp.ne.s32.totalorder %s150, %s153
    %p159 = scmp.eq.s32.totalorder %s20, 0
    %p160 = por %p158, %p159
    %p161 = scmp.ne.s32.totalorder %s150, %s153
    %p162 = scmp.eq.s32.totalorder %s25, 1
    %p163 = por %p161, %p162
    %p164 = scmp.ne.s32.totalorder %s153, %s154
    %p165 = scmp.eq.s32.totalorder %s25, 0
    %p166 = por %p164, %p165
    %p167 = scmp.ne.s32.totalorder %s153, %s154
    %p168 = scmp.eq.s32.totalorder %s26, 1
    %p169 = por %p167, %p168
    %p171 = scmp.ne.s32.totalorder %s154, %s170
    %p172 = scmp.eq.s32.totalorder %s26, 0
    %p173 = por %p171, %p172
    %s175 = sadd.s32 %s174, 1
    %p178 = scmp.eq.s32.totalorder %s20, 1
    %p179 = scmp.ne.s32.totalorder %s174, %s176
    %p180 = scmp.eq.s32.totalorder %s20, 0
    %p181 = por %p179, %p180
    %p182 = scmp.ne.s32.totalorder %s174, %s176
    %p183 = scmp.eq.s32.totalorder %s25, 1
    %p184 = por %p182, %p183
    %p185 = scmp.ne.s32.totalorder %s176, %s177
    %p186 = scmp.eq.s32.totalorder %s25, 0
    %p187 = por %p185, %p186
    %p188 = scmp.ne.s32.totalorder %s176, %s177
    %p189 = scmp.eq.s32.totalorder %s26, 1
    %p190 = por %p188, %p189
    %p192 = scmp.ne.s32.totalorder %s177, %s191
    %p193 = scmp.eq.s32.totalorder %s26, 0
    %p194 = por %p192, %p193
    %s196 = sadd.s32 %s195, 1
    %p199 = scmp.eq.s32.totalorder %s20, 1
    %p200 = scmp.ne.s32.totalorder %s195, %s197
    %p201 = scmp.eq.s32.totalorder %s20, 0
    %p202 = por %p200, %p201
    %p203 = scmp.ne.s32.totalorder %s195, %s197
    %p204 = scmp.eq.s32.totalorder %s25, 1
    %p205 = por %p203, %p204
    %p206 = scmp.ne.s32.totalorder %s197, %s198
    %p207 = scmp.eq.s32.totalorder %s25, 0
    %p208 = por %p206, %p207
    %p209 = scmp.ne.s32.totalorder %s197, %s198
    %p210 = scmp.eq.s32.totalorder %s26, 1
    %p211 = por %p209, %p210
    %p213 = scmp.ne.s32.totalorder %s198, %s212
    %p214 = scmp.eq.s32.totalorder %s26, 0
    %p215 = por %p213, %p214
    %s217 = sadd.s32 %s216, 1
    %p220 = scmp.eq.s32.totalorder %s20, 1
    %p221 = scmp.ne.s32.totalorder %s216, %s218
    %p222 = scmp.eq.s32.totalorder %s20, 0
    %p223 = por %p221, %p222
    %p224 = scmp.ne.s32.totalorder %s216, %s218
    %p225 = scmp.eq.s32.totalorder %s25, 1
    %p226 = por %p224, %p225
    %p227 = scmp.ne.s32.totalorder %s218, %s219
    %p228 = scmp.eq.s32.totalorder %s25, 0
    %p229 = por %p227, %p228
    %p230 = scmp.ne.s32.totalorder %s218, %s219
    %p231 = scmp.eq.s32.totalorder %s26, 1
    %p232 = por %p230, %p231
    %p234 = scmp.ne.s32.totalorder %s219, %s233
    %p235 = scmp.eq.s32.totalorder %s26, 0
    %p236 = por %p234, %p235
    %s238 = sadd.s32 %s237, 1
    %p241 = scmp.eq.s32.totalorder %s20, 1
    %p242 = scmp.ne.s32.totalorder %s237, %s239
    %p243 = scmp.eq.s32.totalorder %s20, 0
    %p244 = por %p242, %p243
    %p245 = scmp.ne.s32.totalorder %s237, %s239
    %p246 = scmp.eq.s32.totalorder %s25, 1
    %p247 = por %p245, %p246
    %p248 = scmp.ne.s32.totalorder %s239, %s240
    %p249 = scmp.eq.s32.totalorder %s25, 0
    %p250 = por %p248, %p249
    %p251 = scmp.ne.s32.totalorder %s239, %s240
    %p252 = scmp.eq.s32.totalorder %s26, 1
    %p253 = por %p251, %p252
    %p255 = scmp.ne.s32.totalorder %s240, %s254
    %p256 = scmp.eq.s32.totalorder %s26, 0
    %p257 = por %p255, %p256
    %s259 = sadd.s32 %s258, 1
    %p262 = scmp.eq.s32.totalorder %s20, 1
    %p263 = scmp.ne.s32.totalorder %s258, %s260
    %p264 = scmp.eq.s32.totalorder %s20, 0
    %p265 = por %p263, %p264
    %p266 = scmp.ne.s32.totalorder %s258, %s260
    %p267 = scmp.eq.s32.totalorder %s25, 1
    %p268 = por %p266, %p267
    %p269 = scmp.ne.s32.totalorder %s260, %s261
    %p270 = scmp.eq.s32.totalorder %s25, 0
    %p271 = por %p269, %p270
    %p272 = scmp.ne.s32.totalorder %s260, %s261
    %p273 = scmp.eq.s32.totalorder %s26, 1
    %p274 = por %p272, %p273
    %p276 = scmp.ne.s32.totalorder %s261, %s275
    %p277 = scmp.eq.s32.totalorder %s26, 0
    %p278 = por %p276, %p277
    %s280 = sadd.s32 %s279, 1
    %p283 = scmp.eq.s32.totalorder %s20, 1
    %p284 = scmp.ne.s32.totalorder %s279, %s281
    %p285 = scmp.eq.s32.totalorder %s20, 0
    %p286 = por %p284, %p285
    %p287 = scmp.ne.s32.totalorder %s279, %s281
    %p288 = scmp.eq.s32.totalorder %s25, 1
    %p289 = por %p287, %p288
    %p290 = scmp.ne.s32.totalorder %s281, %s282
    %p291 = scmp.eq.s32.totalorder %s25, 0
    %p292 = por %p290, %p291
    %p293 = scmp.ne.s32.totalorder %s281, %s282
    %p294 = scmp.eq.s32.totalorder %s26, 1
    %p295 = por %p293, %p294
    %p297 = scmp.ne.s32.totalorder %s282, %s296
    %p298 = scmp.eq.s32.totalorder %s26, 0
    %p299 = por %p297, %p298
    %s301 = sadd.s32 %s300, 1
    %p304 = scmp.eq.s32.totalorder %s20, 1
    %p305 = scmp.ne.s32.totalorder %s300, %s302
    %p306 = scmp.eq.s32.totalorder %s20, 0
    %p307 = por %p305, %p306
    %p308 = scmp.ne.s32.totalorder %s300, %s302
    %p309 = scmp.eq.s32.totalorder %s25, 1
    %p310 = por %p308, %p309
    %p311 = scmp.ne.s32.totalorder %s302, %s303
    %p312 = scmp.eq.s32.totalorder %s25, 0
    %p313 = por %p311, %p312
    %p314 = scmp.ne.s32.totalorder %s302, %s303
    %p315 = scmp.eq.s32.totalorder %s26, 1
    %p316 = por %p314, %p315
    %p318 = scmp.ne.s32.totalorder %s303, %s317
    %p319 = scmp.eq.s32.totalorder %s26, 0
    %p320 = por %p318, %p319
    %s322 = sadd.s32 %s321, 1
    %p325 = scmp.eq.s32.totalorder %s20, 1
    %p326 = scmp.ne.s32.totalorder %s321, %s323
    %p327 = scmp.eq.s32.totalorder %s20, 0
    %p328 = por %p326, %p327
    %p329 = scmp.ne.s32.totalorder %s321, %s323
    %p330 = scmp.eq.s32.totalorder %s25, 1
    %p331 = por %p329, %p330
    %p332 = scmp.ne.s32.totalorder %s323, %s324
    %p333 = scmp.eq.s32.totalorder %s25, 0
    %p334 = por %p332, %p333
    %p335 = scmp.ne.s32.totalorder %s323, %s324
    %p336 = scmp.eq.s32.totalorder %s26, 1
    %p337 = por %p335, %p336
    %p339 = scmp.ne.s32.totalorder %s324, %s338
    %p340 = scmp.eq.s32.totalorder %s26, 0
    %p341 = por %p339, %p340
    %s343 = sadd.s32 %s342, 1
    %p346 = scmp.eq.s32.totalorder %s20, 1
    %p347 = scmp.ne.s32.totalorder %s342, %s344
    %p348 = scmp.eq.s32.totalorder %s20, 0
    %p349 = por %p347, %p348
    %p350 = scmp.ne.s32.totalorder %s342, %s344
    %p351 = scmp.eq.s32.totalorder %s25, 1
    %p352 = por %p350, %p351
    %p353 = scmp.ne.s32.totalorder %s344, %s345
    %p354 = scmp.eq.s32.totalorder %s25, 0
    %p355 = por %p353, %p354
    %p356 = scmp.ne.s32.totalorder %s344, %s345
    %p357 = scmp.eq.s32.totalorder %s26, 1
    %p358 = por %p356, %p357
    %p360 = scmp.ne.s32.totalorder %s345, %s359
    %p361 = scmp.eq.s32.totalorder %s26, 0
    %p362 = por %p360, %p361
    %p363 = scmp.le.s32.totalorder 1, %s20
    %p364 = scmp.lt.s32.totalorder %s20, 3
    %p365 = pnand %p363, %p364
    %p366 = pneg %p365
    // Predicated region
    $region9: #{tpu_custom_call.1} parent=5 // pred_check
      _
    $region10: #{tpu_custom_call.1} parent=5 // pred_check_branch
      %368 = sbr.rel (%p365) target = $region12
    $region11: #{tpu_custom_call.1} parent=5 // pred_region
      %s369 = ssub.s32 %s20, 1
      // Predicated region
      $region13: #{tpu_custom_call.1} parent=11 // pred_check
        %p370 = pneg %p41
      $region14: #{tpu_custom_call.1} parent=11 // pred_check_branch
        %372 = sbr.rel (%p370) target = $region16
      $region15: #{tpu_custom_call.1} parent=11 // pred_region
        _
      $region16: #{tpu_custom_call.1} parent=11 // pred_fallthru
        _
      // Predicated region
      $region17: #{tpu_custom_call.1} parent=11 // pred_check
        %p373 = pneg %p62
      $region18: #{tpu_custom_call.1} parent=11 // pred_check_branch
        %375 = sbr.rel (%p373) target = $region20
      $region19: #{tpu_custom_call.1} parent=11 // pred_region
        _
      $region20: #{tpu_custom_call.1} parent=11 // pred_fallthru
        _
      // Predicated region
      $region21: #{tpu_custom_call.1} parent=11 // pred_check
        %p376 = pneg %p187
      $region22: #{tpu_custom_call.1} parent=11 // pred_check_branch
        %378 = sbr.rel (%p376) target = $region24
      $region23: #{tpu_custom_call.1} parent=11 // pred_region
        _
      $region24: #{tpu_custom_call.1} parent=11 // pred_fallthru
        _
      // Predicated region
      $region25: #{tpu_custom_call.1} parent=11 // pred_check
        %p379 = pneg %p208
      $region26: #{tpu_custom_call.1} parent=11 // pred_check_branch
        %381 = sbr.rel (%p379) target = $region28
      $region27: #{tpu_custom_call.1} parent=11 // pred_region
        _
      $region28: #{tpu_custom_call.1} parent=11 // pred_fallthru
        _
      // Predicated region
      $region29: #{tpu_custom_call.1} parent=11 // pred_check
        %p382 = pneg %p229
      $region30: #{tpu_custom_call.1} parent=11 // pred_check_branch
        %384 = sbr.rel (%p382) target = $region32
      $region31: #{tpu_custom_call.1} parent=11 // pred_region
        _
      $region32: #{tpu_custom_call.1} parent=11 // pred_fallthru
        _
      // Predicated region
      $region33: #{tpu_custom_call.1} parent=11 // pred_check
        %p385 = pneg %p250
      $region34: #{tpu_custom_call.1} parent=11 // pred_check_branch
        %387 = sbr.rel (%p385) target = $region36
      $region35: #{tpu_custom_call.1} parent=11 // pred_region
        _
      $region36: #{tpu_custom_call.1} parent=11 // pred_fallthru
        _
      // Predicated region
      $region37: #{tpu_custom_call.1} parent=11 // pred_check
        %p388 = pneg %p271
      $region38: #{tpu_custom_call.1} parent=11 // pred_check_branch
        %390 = sbr.rel (%p388) target = $region40
      $region39: #{tpu_custom_call.1} parent=11 // pred_region
        _
      $region40: #{tpu_custom_call.1} parent=11 // pred_fallthru
        _
      // Predicated region
      $region41: #{tpu_custom_call.1} parent=11 // pred_check
        %p391 = pneg %p292
      $region42: #{tpu_custom_call.1} parent=11 // pred_check_branch
        %393 = sbr.rel (%p391) target = $region44
      $region43: #{tpu_custom_call.1} parent=11 // pred_region
        _
      $region44: #{tpu_custom_call.1} parent=11 // pred_fallthru
        _
      // Predicated region
      $region45: #{tpu_custom_call.1} parent=11 // pred_check
        %p394 = pneg %p313
      $region46: #{tpu_custom_call.1} parent=11 // pred_check_branch
        %396 = sbr.rel (%p394) target = $region48
      $region47: #{tpu_custom_call.1} parent=11 // pred_region
        _
      $region48: #{tpu_custom_call.1} parent=11 // pred_fallthru
        _
      // Predicated region
      $region49: #{tpu_custom_call.1} parent=11 // pred_check
        %p397 = pneg %p334
      $region50: #{tpu_custom_call.1} parent=11 // pred_check_branch
        %399 = sbr.rel (%p397) target = $region52
      $region51: #{tpu_custom_call.1} parent=11 // pred_region
        _
      $region52: #{tpu_custom_call.1} parent=11 // pred_fallthru
        _
    $region12: #{tpu_custom_call.1} parent=5 // pred_fallthru
      _
    %p400 = scmp.lt.s32.totalorder %s20, 2
    // Predicated region
    $region53: #{tpu_custom_call.1} parent=5 // pred_check
      %p401 = pneg %p400
    $region54: #{tpu_custom_call.1} parent=5 // pred_check_branch
      %403 = sbr.rel (%p401) target = $region56
    $region55: #{tpu_custom_call.1} parent=5 // pred_region
      // Predicated region
      $region57: #{tpu_custom_call.1} parent=55 // pred_check
        %p404 = pneg %p82
      $region58: #{tpu_custom_call.1} parent=55 // pred_check_branch
        %406 = sbr.rel (%p404) target = $region60
      $region59: #{tpu_custom_call.1} parent=55 // pred_region
        %p407 = scmp.lt.s32.totalorder %s20, 1
        %s408 = scalar_select %p407, %s20, 1
        %s409 = smul.addr %s408, 2
        %s410 = smul.addr %s409, 4
        %s411 = scalar_lea.vmem %s2, %s410
      $region60: #{tpu_custom_call.1} parent=55 // pred_fallthru
        _
      // Predicated region
      $region61: #{tpu_custom_call.1} parent=55 // pred_check
        %p412 = pneg %p108
      $region62: #{tpu_custom_call.1} parent=55 // pred_check_branch
        %414 = sbr.rel (%p412) target = $region64
      $region63: #{tpu_custom_call.1} parent=55 // pred_region
        %p415 = scmp.lt.s32.totalorder %s20, 1
        %s416 = scalar_select %p415, %s20, 1
        %s417 = smul.addr %s416, 4
        %s418 = smul.addr %s417, 4
        %s419 = scalar_lea.vmem %s3, %s418
      $region64: #{tpu_custom_call.1} parent=55 // pred_fallthru
        _
      // Predicated region
      $region65: #{tpu_custom_call.1} parent=55 // pred_check
        %p420 = pneg %p134
      $region66: #{tpu_custom_call.1} parent=55 // pred_check_branch
        %422 = sbr.rel (%p420) target = $region68
      $region67: #{tpu_custom_call.1} parent=55 // pred_region
        %p423 = scmp.lt.s32.totalorder %s20, 1
        %s424 = scalar_select %p423, %s20, 1
        %s425 = scalar_lea.vmem %s4, %s424
      $region68: #{tpu_custom_call.1} parent=55 // pred_fallthru
        _
      // Predicated region
      $region69: #{tpu_custom_call.1} parent=55 // pred_check
        %p426 = pneg %p160
      $region70: #{tpu_custom_call.1} parent=55 // pred_check_branch
        %428 = sbr.rel (%p426) target = $region72
      $region71: #{tpu_custom_call.1} parent=55 // pred_region
        %p429 = scmp.lt.s32.totalorder %s20, 1
        %s430 = scalar_select %p429, %s20, 1
        %s431 = scalar_lea.vmem %s5, %s430
      $region72: #{tpu_custom_call.1} parent=55 // pred_fallthru
        _
    $region56: #{tpu_custom_call.1} parent=5 // pred_fallthru
      _
    %p432 = scmp.le.s32.totalorder 1, %s20
    %p433 = scmp.lt.s32.totalorder %s20, 3
    %p434 = pnand %p432, %p433
    %p435 = pneg %p434
    // Predicated region
    $region73: #{tpu_custom_call.1} parent=5 // pred_check
      _
    $region74: #{tpu_custom_call.1} parent=5 // pred_check_branch
      %437 = sbr.rel (%p434) target = $region76
    $region75: #{tpu_custom_call.1} parent=5 // pred_region
      %s438 = ssub.s32 %s20, 1
      %p439 = pneg %p41
      %p440 = pneg %p38
      %p441 = pneg %p62
      %p442 = pneg %p59
      %p443 = scmp.lt.s32.totalorder %s25, 1
      %s444 = scalar_select %p443, %s25, 1
      %s445 = smul.addr %s444, 2
      %s446 = smul.addr %s445, 4
      %s447 = scalar_lea.vmem %s2, %s446
      %p448 = pneg %p88
      %p449 = pneg %p85
      %p450 = scmp.lt.s32.totalorder %s25, 1
      %s451 = scalar_select %p450, %s25, 1
      %s452 = smul.addr %s451, 4
      %s453 = smul.addr %s452, 4
      %s454 = scalar_lea.vmem %s3, %s453
      %p455 = pneg %p114
      %p456 = pneg %p111
      %p457 = scmp.lt.s32.totalorder %s25, 1
      %s458 = scalar_select %p457, %s25, 1
      %s459 = scalar_lea.vmem %s4, %s458
      %p460 = pneg %p140
      %p461 = pneg %p137
      %p462 = scmp.lt.s32.totalorder %s25, 1
      %s463 = scalar_select %p462, %s25, 1
      %s464 = scalar_lea.vmem %s5, %s463
      %p465 = pneg %p166
      %p466 = pneg %p163
      %p467 = pneg %p187
      %p468 = pneg %p184
      %p469 = pneg %p208
      %p470 = pneg %p205
      %p471 = pneg %p229
      %p472 = pneg %p226
      %p473 = pneg %p250
      %p474 = pneg %p247
      %p475 = pneg %p271
      %p476 = pneg %p268
      %p477 = pneg %p292
      %p478 = pneg %p289
      %p479 = pneg %p313
      %p480 = pneg %p310
      %p481 = pneg %p334
      %p482 = pneg %p331
      %p483 = pneg %p355
      %p484 = pneg %p352
      %p485 = scmp.lt.s32.totalorder %s25, 1
      %s486 = scalar_select %p485, %s25, 1
      %s487 = smul.addr %s486, 2
      %s488 = smul.addr %s487, 4
      %s489 = scalar_lea.vmem %s2, %s488
      %p490 = scmp.lt.s32.totalorder %s25, 1
      %s491 = scalar_select %p490, %s25, 1
      %s492 = smul.addr %s491, 4
      %s493 = smul.addr %s492, 4
      %s494 = scalar_lea.vmem %s3, %s493
      %p495 = scmp.lt.s32.totalorder %s25, 1
      %s496 = scalar_select %p495, %s25, 1
      %s497 = scalar_lea.vmem %s4, %s496
      %p498 = scmp.lt.s32.totalorder %s25, 1
      %s499 = scalar_select %p498, %s25, 1
      %s500 = scalar_lea.vmem %s5, %s499
      %p502 = scmp.eq.s32.totalorder %s25, 0
      // Predicated region
      $region77: #{tpu_custom_call.1} parent=75 // pred_check
        %p503 = pneg %p502
      $region78: #{tpu_custom_call.1} parent=75 // pred_check_branch
        %505 = sbr.rel (%p503) target = $region80
      $region79: #{tpu_custom_call.1} parent=75 // pred_region
        %v506 = vld [vmem:[%s0] sm:$0xff]
        %v507 = vld [vmem:[%s0 + $0x8] sm:$0xff]
        %vm508 = vcmask 261120
        %509 = vst.msk [vmem:[#allocation2] sm:$0xff] %vm508, %v506
        %510 = vst.msk [vmem:[#allocation2 + $0x8] sm:$0xff] %vm508, %v507
      $region80: #{tpu_custom_call.1} parent=75 // pred_fallthru
        _
      %v511 = vld [vmem:[#allocation2] sm:$0xff]
      %v512 = vld [vmem:[#allocation2 + $0x8] sm:$0xff]
      %v513 = vpack.c.bf16 %v512, %v511
      %v514 = vld [vmem:[%s494] sm:$0xf]
      %v515 = vld [vmem:[%s494 + $0x4] sm:$0xf]
      %v516 = vld [vmem:[%s494 + $0x8] sm:$0xf]
      %v517 = vld [vmem:[%s494 + $0xc] sm:$0xf]
      %v518 = vld [vmem:[%s497] sm:$0x1]
      %v520 = vlaneseq
      %v521 = vshrl.u32 %v520, 7
      %v522 = vsub.s32 0, %v521
      %v523 = vrot.slane %v518, %v522
      %v529 = vunpack.c.l.b16 %v514
      %v530 = vunpack.c.l.b16 %v515
      %v531 = vunpack.c.l.b16 %v516
      %v532 = vunpack.c.l.b16 %v517
      %v533 = vpack.c.b16 %v530, %v529
      %v534 = vpack.c.b16 %v532, %v531
      %vm537 = vcmask 261120
      %v539 = vsel %vm537, %v513, 0
      %541 = vmatprep.subr.bf16.mxu0 0
      %542 = vmatpush1.bf16.msra.mxu0 0
      %543 = vmatprep.subr.bf16.mxu0 0
      %544 = vmatpush1.bf16.msra.mxu0 0
      %545 = vmatprep.subr.bf16.mxu0 0
      %546 = vmatpush1.bf16.msra.mxu0 0
      %547 = vmatprep.subr.bf16.mxu0 0
      %548 = vmatpush1.bf16.msra.mxu0 0
      %549 = vmatprep.subr.bf16.mxu0 0
      %550 = vmatpush1.bf16.msra.mxu0 0
      %551 = vmatprep.subr.bf16.mxu0 0
      %552 = vmatpush1.bf16.msra.mxu0 0
      %553 = vmatprep.subr.bf16.mxu0 0
      %554 = vmatpush1.bf16.msra.mxu0 %v534
      %555 = vmatprep.subr.bf16.mxu0 0
      %556 = vmatpush1.bf16.msra.mxu0 %v533
      %557 = vmatprep.subr.bf16.mxu0 0
      %558 = vmatpush2.bf16.msra.mxu0 0
      %559 = vmatprep.subr.bf16.mxu0 0
      %560 = vmatpush2.bf16.msra.mxu0 0
      %561 = vmatprep.subr.bf16.mxu0 0
      %562 = vmatpush2.bf16.msra.mxu0 0
      %563 = vmatprep.subr.bf16.mxu0 0
      %564 = vmatpush2.bf16.msra.mxu0 0
      %565 = vmatprep.subr.bf16.mxu0 0
      %566 = vmatpush2.bf16.msra.mxu0 0
      %567 = vmatprep.subr.bf16.mxu0 0
      %568 = vmatpush2.bf16.msra.mxu0 0
      %569 = vmatprep.subr.bf16.mxu0 0
      %570 = vmatpush2.bf16.msra.mxu0 0
      %571 = vmatprep.subr.bf16.mxu0 0
      %572 = vmatpush2.bf16.msra.mxu0 0
      %573 = vmatprep.mubr.bf16.mxu0 0
      %574 = vmatmul.mubr.bf16.gmra.mxu0 %v539
      %v575 = vpop.f32.mrf.mxu0
      %v576 = vadd.f32 %v523, %v575
      %v577 = vpop.f32.mrf.mxu0
      %v578 = vpop.f32.mrf.mxu0
      %v579 = vadd.f32 %v523, %v578
      %v580 = vpop.f32.mrf.mxu0
      %581 = vdwg.mxu0
      %v582 = vld [vmem:[%s489] sm:$0xf]
      %v583 = vld [vmem:[%s489 + $0x4] sm:$0xf]
      %v584 = vunpack.c.l.bf16 %v582
      %v585 = vunpack.c.l.bf16 %v583
      %588 = vrot.lane.b32.xlu0 %v576, 96
      %v589 = vpop.permute.xlu0 %588
      %590 = vrot.lane.b32.xlu0 %v579, 96
      %v591 = vpop.permute.xlu0 %590
      %592 = vrot.lane.b32.xlu0 %v576, 95
      %v593 = vpop.permute.xlu0 %592
      %594 = vrot.lane.b32.xlu0 %v579, 95
      %v595 = vpop.permute.xlu0 %594
      %vm596 = vcmask 15360
      %v597 = vsel %vm596, %v589, 0
      %v599 = vsel %vm596, %v591, 0
      %v601 = vsel %vm596, %v593, 0
      %v603 = vsel %vm596, %v595, 0
      %605 = vmatprep.subr.mxu0 0.0
      %606 = vmatpush1.xpose.msra.mxu0 0.0
      %607 = vmatprep.subr.mxu0 0.0
      %608 = vmatpush1.xpose.msra.mxu0 0.0
      %609 = vmatprep.subr.mxu0 0.0
      %610 = vmatpush1.xpose.msra.mxu0 0.0
      %611 = vmatprep.subr.mxu0 0.0
      %612 = vmatpush1.xpose.msra.mxu0 0.0
      %613 = vmatprep.subr.mxu0 0.0
      %614 = vmatpush1.xpose.msra.mxu0 0.0
      %615 = vmatprep.subr.mxu0 0.0
      %616 = vmatpush1.xpose.msra.mxu0 0.0
      %617 = vmatprep.subr.mxu0 0.0
      %618 = vmatpush1.xpose.msra.mxu0 0.0
      %619 = vmatprep.subr.mxu0 0.0
      %620 = vmatpush1.xpose.msra.mxu0 0.0
      %621 = vmatprep.subr.mxu0 0.0
      %622 = vmatpush1.xpose.msra.mxu0 0.0
      %623 = vmatprep.subr.mxu0 0.0
      %624 = vmatpush1.xpose.msra.mxu0 0.0
      %625 = vmatprep.subr.mxu0 0.0
      %626 = vmatpush1.xpose.msra.mxu0 0.0
      %627 = vmatprep.subr.mxu0 0.0
      %628 = vmatpush1.xpose.msra.mxu0 0.0
      %629 = vmatprep.subr.mxu0 0.0
      %630 = vmatpush1.xpose.msra.mxu0 0.0
      %631 = vmatprep.subr.mxu0 0.0
      %632 = vmatpush1.xpose.msra.mxu0 0.0
      %633 = vmatprep.subr.mxu0 0.0
      %634 = vmatpush1.xpose.msra.mxu0 %v603
      %635 = vmatprep.subr.mxu0 0.0
      %636 = vmatpush1.xpose.msra.mxu0 %v601
      %637 = vmatprep.subr.mxu0 0.0
      %638 = vmatpush2.xpose.msra.mxu0 0.0
      %639 = vmatprep.subr.mxu0 0.0
      %640 = vmatpush2.xpose.msra.mxu0 0.0
      %641 = vmatprep.subr.mxu0 0.0
      %642 = vmatpush2.xpose.msra.mxu0 0.0
      %643 = vmatprep.subr.mxu0 0.0
      %644 = vmatpush2.xpose.msra.mxu0 0.0
      %645 = vmatprep.subr.mxu0 0.0
      %646 = vmatpush2.xpose.msra.mxu0 0.0
      %647 = vmatprep.subr.mxu0 0.0
      %648 = vmatpush2.xpose.msra.mxu0 0.0
      %649 = vmatprep.subr.mxu0 0.0
      %650 = vmatpush2.xpose.msra.mxu0 0.0
      %651 = vmatprep.subr.mxu0 0.0
      %652 = vmatpush2.xpose.msra.mxu0 0.0
      %653 = vmatprep.subr.mxu0 0.0
      %654 = vmatpush2.xpose.msra.mxu0 0.0
      %655 = vmatprep.subr.mxu0 0.0
      %656 = vmatpush2.xpose.msra.mxu0 0.0
      %657 = vmatprep.subr.mxu0 0.0
      %658 = vmatpush2.xpose.msra.mxu0 0.0
      %659 = vmatprep.subr.mxu0 0.0
      %660 = vmatpush2.xpose.msra.mxu0 0.0
      %661 = vmatprep.subr.mxu0 0.0
      %662 = vmatpush2.xpose.msra.mxu0 0.0
      %663 = vmatprep.subr.mxu0 0.0
      %664 = vmatpush2.xpose.msra.mxu0 0.0
      %665 = vmatprep.subr.mxu0 0.0
      %666 = vmatpush2.xpose.msra.mxu0 0.0
      %667 = vmatprep.subr.mxu0 0.0
      %668 = vmatpush2.xpose.msra.mxu0 0.0
      %669 = vmatprep.mubr.f32.mxu0 0.0
      %670 = vmatmul.mubr.f32.gmra.mxu0 %v597
      %v671 = vpop.f32.mrf.mxu0
      %v672 = vadd.f32 %v584, %v671
      %v673 = vpop.f32.mrf.mxu0
      %674 = vmatprep.mubr.f32.mxu0 0.0
      %675 = vmatmul.mubr.f32.gmra.mxu0 %v599
      %v676 = vpop.f32.mrf.mxu0
      %v677 = vadd.f32 %v585, %v676
      %v678 = vpop.f32.mrf.mxu0
      %679 = vdwg.mxu0
      %vm680 = vcmp.gt.f32.partialorder %v672, 0.0
      %vm681 = vcmp.gt.f32.partialorder %v677, 0.0
      %v682 = vmul.f32 %v672, 0.2
      %v683 = vmul.f32 %v677, 0.2
      %v684 = vsel %vm680, %v672, %v682
      %v685 = vsel %vm681, %v677, %v683
      %vm686 = vcmask 130048
      %v687 = vsel %vm686, %v684, -inf
      %688 = vmax.xlane.f32.xlu0 %v687
      %v689 = vpop.xlane.xlu0 %688
      %v690 = vsel %vm686, %v685, -inf
      %691 = vmax.xlane.f32.xlu0 %v690
      %v692 = vpop.xlane.xlu0 %691
      %v693 = vsub.f32 %v684, %v689
      %v694 = vsub.f32 %v685, %v692
      %v695 = vmul.f32 %v693, 1.442695
      %v696 = vpow.pop %v695
      %v697 = vmul.f32 %v694, 1.442695
      %v698 = vpow.pop %v697
      %v699 = vsel %vm686, %v696, 0.0
      %700 = vadd.xlane.f32.xlu0 %v699
      %v701 = vpop.xlane.xlu0 %700
      %v702 = vsel %vm686, %v698, 0.0
      %703 = vadd.xlane.f32.xlu0 %v702
      %v704 = vpop.xlane.xlu0 %703
      %v705 = vpack.c.bf16 %v698, %v696
      %v706 = vpack.c.bf16 %v579, %v576
      %v708 = vsel %vm686, %v705, 0
      %710 = vmatprep.subr.bf16.mxu0 0
      %711 = vmatpush1.bf16.msra.mxu0 0
      %712 = vmatprep.subr.bf16.mxu0 0
      %713 = vmatpush1.bf16.msra.mxu0 0
      %714 = vmatprep.subr.bf16.mxu0 0
      %715 = vmatpush1.bf16.msra.mxu0 0
      %716 = vmatprep.subr.bf16.mxu0 0
      %717 = vmatpush1.bf16.msra.mxu0 0
      %718 = vmatprep.subr.bf16.mxu0 0
      %719 = vmatpush1.bf16.msra.mxu0 0
      %720 = vmatprep.subr.bf16.mxu0 0
      %721 = vmatpush1.bf16.msra.mxu0 0
      %722 = vmatprep.subr.bf16.mxu0 0
      %723 = vmatpush1.bf16.msra.mxu0 0
      %724 = vmatprep.subr.bf16.mxu0 0
      %725 = vmatpush1.bf16.msra.mxu0 %v706
      %726 = vmatprep.subr.bf16.mxu0 0
      %727 = vmatpush2.bf16.msra.mxu0 0
      %728 = vmatprep.subr.bf16.mxu0 0
      %729 = vmatpush2.bf16.msra.mxu0 0
      %730 = vmatprep.subr.bf16.mxu0 0
      %731 = vmatpush2.bf16.msra.mxu0 0
      %732 = vmatprep.subr.bf16.mxu0 0
      %733 = vmatpush2.bf16.msra.mxu0 0
      %734 = vmatprep.subr.bf16.mxu0 0
      %735 = vmatpush2.bf16.msra.mxu0 0
      %736 = vmatprep.subr.bf16.mxu0 0
      %737 = vmatpush2.bf16.msra.mxu0 0
      %738 = vmatprep.subr.bf16.mxu0 0
      %739 = vmatpush2.bf16.msra.mxu0 0
      %740 = vmatprep.subr.bf16.mxu0 0
      %741 = vmatpush2.bf16.msra.mxu0 0
      %742 = vmatprep.mubr.bf16.mxu0 0
      %743 = vmatmul.mubr.bf16.gmra.mxu0 %v708
      %v744 = vpop.f32.mrf.mxu0
      %v745 = vadd.f32 0.0, %v744
      %v746 = vpop.f32.mrf.mxu0
      %v747 = vpop.f32.mrf.mxu0
      %v748 = vadd.f32 0.0, %v747
      %v749 = vpop.f32.mrf.mxu0
      %750 = vdwg.mxu0
      %v751 = vrcp.pop %v701
      %v752 = vrcp.pop %v704
      %v753 = vmul.f32 %v745, %v751
      %v754 = vmul.f32 %v748, %v752
      %v755 = vld [vmem:[%s500] sm:$0x1]
      %v757 = vlaneseq
      %v758 = vshrl.u32 %v757, 7
      %v759 = vsub.s32 0, %v758
      %v760 = vrot.slane %v755, %v759
      %v762 = vadd.f32 %v753, %v760
      %v763 = vadd.f32 %v754, %v760
      %v764 = vmax.f32 %v762, 0.0
      %v765 = vmax.f32 %v763, 0.0
      %766 = vst.msk [vmem:[#allocation2] sm:$0xff] %vm537, %v764
      %767 = vst.msk [vmem:[#allocation2 + $0x8] sm:$0xff] %vm537, %v765
      %p768 = scmp.eq.s32.totalorder %s25, 1
      // Predicated region
      $region81: #{tpu_custom_call.1} parent=75 // pred_check
        %p769 = pneg %p768
      $region82: #{tpu_custom_call.1} parent=75 // pred_check_branch
        %771 = sbr.rel (%p769) target = $region84
      $region83: #{tpu_custom_call.1} parent=75 // pred_region
        %v772 = vpack.c.bf16 %v765, %v764
        %v773 = vld [vmem:[%s6] sm:$0xf]
        %v774 = vld [vmem:[%s6 + $0x4] sm:$0xf]
        %v775 = vld [vmem:[%s6 + $0x8] sm:$0xf]
        %v776 = vld [vmem:[%s6 + $0xc] sm:$0xf]
        %v777 = vld [vmem:[%s7] sm:$0x1]
        %v779 = vlaneseq
        %v780 = vshrl.u32 %v779, 7
        %v781 = vsub.s32 0, %v780
        %v782 = vrot.slane %v777, %v781
        %v788 = vunpack.c.l.b16 %v773
        %v789 = vunpack.c.l.b16 %v774
        %v790 = vunpack.c.l.b16 %v775
        %v791 = vunpack.c.l.b16 %v776
        %v792 = vpack.c.b16 %v789, %v788
        %v793 = vpack.c.b16 %v791, %v790
        %v797 = vsel %vm537, %v772, 0
        %799 = vmatprep.subr.bf16.mxu0 0
        %800 = vmatpush1.bf16.msra.mxu0 0
        %801 = vmatprep.subr.bf16.mxu0 0
        %802 = vmatpush1.bf16.msra.mxu0 0
        %803 = vmatprep.subr.bf16.mxu0 0
        %804 = vmatpush1.bf16.msra.mxu0 0
        %805 = vmatprep.subr.bf16.mxu0 0
        %806 = vmatpush1.bf16.msra.mxu0 0
        %807 = vmatprep.subr.bf16.mxu0 0
        %808 = vmatpush1.bf16.msra.mxu0 0
        %809 = vmatprep.subr.bf16.mxu0 0
        %810 = vmatpush1.bf16.msra.mxu0 0
        %811 = vmatprep.subr.bf16.mxu0 0
        %812 = vmatpush1.bf16.msra.mxu0 %v793
        %813 = vmatprep.subr.bf16.mxu0 0
        %814 = vmatpush1.bf16.msra.mxu0 %v792
        %815 = vmatprep.subr.bf16.mxu0 0
        %816 = vmatpush2.bf16.msra.mxu0 0
        %817 = vmatprep.subr.bf16.mxu0 0
        %818 = vmatpush2.bf16.msra.mxu0 0
        %819 = vmatprep.subr.bf16.mxu0 0
        %820 = vmatpush2.bf16.msra.mxu0 0
        %821 = vmatprep.subr.bf16.mxu0 0
        %822 = vmatpush2.bf16.msra.mxu0 0
        %823 = vmatprep.subr.bf16.mxu0 0
        %824 = vmatpush2.bf16.msra.mxu0 0
        %825 = vmatprep.subr.bf16.mxu0 0
        %826 = vmatpush2.bf16.msra.mxu0 0
        %827 = vmatprep.subr.bf16.mxu0 0
        %828 = vmatpush2.bf16.msra.mxu0 0
        %829 = vmatprep.subr.bf16.mxu0 0
        %830 = vmatpush2.bf16.msra.mxu0 0
        %831 = vmatprep.mubr.bf16.mxu0 0
        %832 = vmatmul.mubr.bf16.gmra.mxu0 %v797
        %v833 = vpop.f32.mrf.mxu0
        %v834 = vadd.f32 %v782, %v833
        %v835 = vpop.f32.mrf.mxu0
        %v836 = vpop.f32.mrf.mxu0
        %v837 = vadd.f32 %v782, %v836
        %v838 = vpop.f32.mrf.mxu0
        %839 = vdwg.mxu0
        %v840 = vpack.c.bf16 %v837, %v834
        %v842 = vsel %vm537, %v840, 0
        %844 = vmatprep.subr.bf16.mxu0 0
        %845 = vmatpush1.bf16.xpose.msra.mxu0 0
        %846 = vmatprep.subr.bf16.mxu0 0
        %847 = vmatpush1.bf16.xpose.msra.mxu0 0
        %848 = vmatprep.subr.bf16.mxu0 0
        %849 = vmatpush1.bf16.xpose.msra.mxu0 0
        %850 = vmatprep.subr.bf16.mxu0 0
        %851 = vmatpush1.bf16.xpose.msra.mxu0 0
        %852 = vmatprep.subr.bf16.mxu0 0
        %853 = vmatpush1.bf16.xpose.msra.mxu0 0
        %854 = vmatprep.subr.bf16.mxu0 0
        %855 = vmatpush1.bf16.xpose.msra.mxu0 0
        %856 = vmatprep.subr.bf16.mxu0 0
        %857 = vmatpush1.bf16.xpose.msra.mxu0 0
        %858 = vmatprep.subr.bf16.mxu0 0
        %859 = vmatpush1.bf16.xpose.msra.mxu0 %v842
        %860 = vmatprep.subr.bf16.mxu0 0
        %861 = vmatpush2.bf16.xpose.msra.mxu0 0
        %862 = vmatprep.subr.bf16.mxu0 0
        %863 = vmatpush2.bf16.xpose.msra.mxu0 0
        %864 = vmatprep.subr.bf16.mxu0 0
        %865 = vmatpush2.bf16.xpose.msra.mxu0 0
        %866 = vmatprep.subr.bf16.mxu0 0
        %867 = vmatpush2.bf16.xpose.msra.mxu0 0
        %868 = vmatprep.subr.bf16.mxu0 0
        %869 = vmatpush2.bf16.xpose.msra.mxu0 0
        %870 = vmatprep.subr.bf16.mxu0 0
        %871 = vmatpush2.bf16.xpose.msra.mxu0 0
        %872 = vmatprep.subr.bf16.mxu0 0
        %873 = vmatpush2.bf16.xpose.msra.mxu0 0
        %874 = vmatprep.subr.bf16.mxu0 0
        %875 = vmatpush2.bf16.xpose.msra.mxu0 0
        %876 = vmatprep.mubr.bf16.mxu0 0
        %877 = vmatmul.mubr.bf16.gmra.mxu0 %v842
        %v878 = vpop.f32.mrf.mxu0
        %v879 = vadd.f32 0.0, %v878
        %v880 = vpop.f32.mrf.mxu0
        %v881 = vpop.f32.mrf.mxu0
        %v882 = vadd.f32 0.0, %v881
        %v883 = vpop.f32.mrf.mxu0
        %884 = vdwg.mxu0
        %v885 = vsel %vm686, %v879, -inf
        %886 = vmax.xlane.f32.xlu0 %v885
        %v887 = vpop.xlane.xlu0 %886
        %v888 = vsel %vm686, %v882, -inf
        %889 = vmax.xlane.f32.xlu0 %v888
        %v890 = vpop.xlane.xlu0 %889
        %v891 = vsub.f32 %v879, %v887
        %v892 = vsub.f32 %v882, %v890
        %v893 = vmul.f32 %v891, 1.442695
        %v894 = vpow.pop %v893
        %v895 = vmul.f32 %v892, 1.442695
        %v896 = vpow.pop %v895
        %v897 = vsel %vm686, %v894, 0.0
        %898 = vadd.xlane.f32.xlu0 %v897
        %v899 = vpop.xlane.xlu0 %898
        %v900 = vsel %vm686, %v896, 0.0
        %901 = vadd.xlane.f32.xlu0 %v900
        %v902 = vpop.xlane.xlu0 %901
        %v903 = vpack.c.bf16 %v896, %v894
        %v905 = vsel %vm686, %v903, 0
        %907 = vmatprep.subr.bf16.mxu0 0
        %908 = vmatpush1.bf16.msra.mxu0 0
        %909 = vmatprep.subr.bf16.mxu0 0
        %910 = vmatpush1.bf16.msra.mxu0 0
        %911 = vmatprep.subr.bf16.mxu0 0
        %912 = vmatpush1.bf16.msra.mxu0 0
        %913 = vmatprep.subr.bf16.mxu0 0
        %914 = vmatpush1.bf16.msra.mxu0 0
        %915 = vmatprep.subr.bf16.mxu0 0
        %916 = vmatpush1.bf16.msra.mxu0 0
        %917 = vmatprep.subr.bf16.mxu0 0
        %918 = vmatpush1.bf16.msra.mxu0 0
        %919 = vmatprep.subr.bf16.mxu0 0
        %920 = vmatpush1.bf16.msra.mxu0 0
        %921 = vmatprep.subr.bf16.mxu0 0
        %922 = vmatpush1.bf16.msra.mxu0 %v772
        %923 = vmatprep.subr.bf16.mxu0 0
        %924 = vmatpush2.bf16.msra.mxu0 0
        %925 = vmatprep.subr.bf16.mxu0 0
        %926 = vmatpush2.bf16.msra.mxu0 0
        %927 = vmatprep.subr.bf16.mxu0 0
        %928 = vmatpush2.bf16.msra.mxu0 0
        %929 = vmatprep.subr.bf16.mxu0 0
        %930 = vmatpush2.bf16.msra.mxu0 0
        %931 = vmatprep.subr.bf16.mxu0 0
        %932 = vmatpush2.bf16.msra.mxu0 0
        %933 = vmatprep.subr.bf16.mxu0 0
        %934 = vmatpush2.bf16.msra.mxu0 0
        %935 = vmatprep.subr.bf16.mxu0 0
        %936 = vmatpush2.bf16.msra.mxu0 0
        %937 = vmatprep.subr.bf16.mxu0 0
        %938 = vmatpush2.bf16.msra.mxu0 0
        %939 = vmatprep.mubr.bf16.mxu0 0
        %940 = vmatmul.mubr.bf16.gmra.mxu0 %v905
        %v941 = vpop.f32.mrf.mxu0
        %v942 = vadd.f32 0.0, %v941
        %v943 = vpop.f32.mrf.mxu0
        %v944 = vpop.f32.mrf.mxu0
        %v945 = vadd.f32 0.0, %v944
        %v946 = vpop.f32.mrf.mxu0
        %947 = vdwg.mxu0
        %v948 = vrcp.pop %v899
        %v949 = vrcp.pop %v902
        %v950 = vmul.f32 %v942, %v948
        %v951 = vmul.f32 %v945, %v949
        %953 = vrot.lane.b32.xlu0 %v840, 96
        %v954 = vpop.permute.xlu0 %953
        %v956 = vsel %vm537, %v954, 0
        %958 = vmatprep.subr.bf16.mxu0 0
        %959 = vmatpush1.bf16.xpose.msra.mxu0 0
        %960 = vmatprep.subr.bf16.mxu0 0
        %961 = vmatpush1.bf16.xpose.msra.mxu0 0
        %962 = vmatprep.subr.bf16.mxu0 0
        %963 = vmatpush1.bf16.xpose.msra.mxu0 0
        %964 = vmatprep.subr.bf16.mxu0 0
        %965 = vmatpush1.bf16.xpose.msra.mxu0 0
        %966 = vmatprep.subr.bf16.mxu0 0
        %967 = vmatpush1.bf16.xpose.msra.mxu0 0
        %968 = vmatprep.subr.bf16.mxu0 0
        %969 = vmatpush1.bf16.xpose.msra.mxu0 0
        %970 = vmatprep.subr.bf16.mxu0 0
        %971 = vmatpush1.bf16.xpose.msra.mxu0 0
        %972 = vmatprep.subr.bf16.mxu0 0
        %973 = vmatpush1.bf16.xpose.msra.mxu0 %v956
        %974 = vmatprep.subr.bf16.mxu0 0
        %975 = vmatpush2.bf16.xpose.msra.mxu0 0
        %976 = vmatprep.subr.bf16.mxu0 0
        %977 = vmatpush2.bf16.xpose.msra.mxu0 0
        %978 = vmatprep.subr.bf16.mxu0 0
        %979 = vmatpush2.bf16.xpose.msra.mxu0 0
        %980 = vmatprep.subr.bf16.mxu0 0
        %981 = vmatpush2.bf16.xpose.msra.mxu0 0
        %982 = vmatprep.subr.bf16.mxu0 0
        %983 = vmatpush2.bf16.xpose.msra.mxu0 0
        %984 = vmatprep.subr.bf16.mxu0 0
        %985 = vmatpush2.bf16.xpose.msra.mxu0 0
        %986 = vmatprep.subr.bf16.mxu0 0
        %987 = vmatpush2.bf16.xpose.msra.mxu0 0
        %988 = vmatprep.subr.bf16.mxu0 0
        %989 = vmatpush2.bf16.xpose.msra.mxu0 0
        %990 = vmatprep.mubr.bf16.mxu0 0
        %991 = vmatmul.mubr.bf16.gmra.mxu0 %v956
        %v992 = vpop.f32.mrf.mxu0
        %v993 = vadd.f32 0.0, %v992
        %v994 = vpop.f32.mrf.mxu0
        %v995 = vpop.f32.mrf.mxu0
        %v996 = vadd.f32 0.0, %v995
        %v997 = vpop.f32.mrf.mxu0
        %998 = vdwg.mxu0
        %v999 = vsel %vm686, %v993, -inf
        %1000 = vmax.xlane.f32.xlu0 %v999
        %v1001 = vpop.xlane.xlu0 %1000
        %v1002 = vsel %vm686, %v996, -inf
        %1003 = vmax.xlane.f32.xlu0 %v1002
        %v1004 = vpop.xlane.xlu0 %1003
        %v1005 = vsub.f32 %v993, %v1001
        %v1006 = vsub.f32 %v996, %v1004
        %v1007 = vmul.f32 %v1005, 1.442695
        %v1008 = vpow.pop %v1007
        %v1009 = vmul.f32 %v1006, 1.442695
        %v1010 = vpow.pop %v1009
        %v1011 = vsel %vm686, %v1008, 0.0
        %1012 = vadd.xlane.f32.xlu0 %v1011
        %v1013 = vpop.xlane.xlu0 %1012
        %v1014 = vsel %vm686, %v1010, 0.0
        %1015 = vadd.xlane.f32.xlu0 %v1014
        %v1016 = vpop.xlane.xlu0 %1015
        %v1017 = vpack.c.bf16 %v1010, %v1008
        %v1019 = vsel %vm686, %v1017, 0
        %1021 = vmatprep.subr.bf16.mxu0 0
        %1022 = vmatpush1.bf16.msra.mxu0 0
        %1023 = vmatprep.subr.bf16.mxu0 0
        %1024 = vmatpush1.bf16.msra.mxu0 0
        %1025 = vmatprep.subr.bf16.mxu0 0
        %1026 = vmatpush1.bf16.msra.mxu0 0
        %1027 = vmatprep.subr.bf16.mxu0 0
        %1028 = vmatpush1.bf16.msra.mxu0 0
        %1029 = vmatprep.subr.bf16.mxu0 0
        %1030 = vmatpush1.bf16.msra.mxu0 0
        %1031 = vmatprep.subr.bf16.mxu0 0
        %1032 = vmatpush1.bf16.msra.mxu0 0
        %1033 = vmatprep.subr.bf16.mxu0 0
        %1034 = vmatpush1.bf16.msra.mxu0 0
        %1035 = vmatprep.subr.bf16.mxu0 0
        %1036 = vmatpush1.bf16.msra.mxu0 %v772
        %1037 = vmatprep.subr.bf16.mxu0 0
        %1038 = vmatpush2.bf16.msra.mxu0 0
        %1039 = vmatprep.subr.bf16.mxu0 0
        %1040 = vmatpush2.bf16.msra.mxu0 0
        %1041 = vmatprep.subr.bf16.mxu0 0
        %1042 = vmatpush2.bf16.msra.mxu0 0
        %1043 = vmatprep.subr.bf16.mxu0 0
        %1044 = vmatpush2.bf16.msra.mxu0 0
        %1045 = vmatprep.subr.bf16.mxu0 0
        %1046 = vmatpush2.bf16.msra.mxu0 0
        %1047 = vmatprep.subr.bf16.mxu0 0
        %1048 = vmatpush2.bf16.msra.mxu0 0
        %1049 = vmatprep.subr.bf16.mxu0 0
        %1050 = vmatpush2.bf16.msra.mxu0 0
        %1051 = vmatprep.subr.bf16.mxu0 0
        %1052 = vmatpush2.bf16.msra.mxu0 0
        %1053 = vmatprep.mubr.bf16.mxu0 0
        %1054 = vmatmul.mubr.bf16.gmra.mxu0 %v1019
        %v1055 = vpop.f32.mrf.mxu0
        %v1056 = vadd.f32 0.0, %v1055
        %v1057 = vpop.f32.mrf.mxu0
        %v1058 = vpop.f32.mrf.mxu0
        %v1059 = vadd.f32 0.0, %v1058
        %v1060 = vpop.f32.mrf.mxu0
        %1061 = vdwg.mxu0
        %v1062 = vrcp.pop %v1013
        %v1063 = vrcp.pop %v1016
        %v1064 = vmul.f32 %v1056, %v1062
        %v1065 = vmul.f32 %v1059, %v1063
        %1066 = vrot.lane.b32.xlu0 %v840, 64
        %v1067 = vpop.permute.xlu0 %1066
        %v1069 = vsel %vm537, %v1067, 0
        %1071 = vmatprep.subr.bf16.mxu0 0
        %1072 = vmatpush1.bf16.xpose.msra.mxu0 0
        %1073 = vmatprep.subr.bf16.mxu0 0
        %1074 = vmatpush1.bf16.xpose.msra.mxu0 0
        %1075 = vmatprep.subr.bf16.mxu0 0
        %1076 = vmatpush1.bf16.xpose.msra.mxu0 0
        %1077 = vmatprep.subr.bf16.mxu0 0
        %1078 = vmatpush1.bf16.xpose.msra.mxu0 0
        %1079 = vmatprep.subr.bf16.mxu0 0
        %1080 = vmatpush1.bf16.xpose.msra.mxu0 0
        %1081 = vmatprep.subr.bf16.mxu0 0
        %1082 = vmatpush1.bf16.xpose.msra.mxu0 0
        %1083 = vmatprep.subr.bf16.mxu0 0
        %1084 = vmatpush1.bf16.xpose.msra.mxu0 0
        %1085 = vmatprep.subr.bf16.mxu0 0
        %1086 = vmatpush1.bf16.xpose.msra.mxu0 %v1069
        %1087 = vmatprep.subr.bf16.mxu0 0
        %1088 = vmatpush2.bf16.xpose.msra.mxu0 0
        %1089 = vmatprep.subr.bf16.mxu0 0
        %1090 = vmatpush2.bf16.xpose.msra.mxu0 0
        %1091 = vmatprep.subr.bf16.mxu0 0
        %1092 = vmatpush2.bf16.xpose.msra.mxu0 0
        %1093 = vmatprep.subr.bf16.mxu0 0
        %1094 = vmatpush2.bf16.xpose.msra.mxu0 0
        %1095 = vmatprep.subr.bf16.mxu0 0
        %1096 = vmatpush2.bf16.xpose.msra.mxu0 0
        %1097 = vmatprep.subr.bf16.mxu0 0
        %1098 = vmatpush2.bf16.xpose.msra.mxu0 0
        %1099 = vmatprep.subr.bf16.mxu0 0
        %1100 = vmatpush2.bf16.xpose.msra.mxu0 0
        %1101 = vmatprep.subr.bf16.mxu0 0
        %1102 = vmatpush2.bf16.xpose.msra.mxu0 0
        %1103 = vmatprep.mubr.bf16.mxu0 0
        %1104 = vmatmul.mubr.bf16.gmra.mxu0 %v1069
        %v1105 = vpop.f32.mrf.mxu0
        %v1106 = vadd.f32 0.0, %v1105
        %v1107 = vpop.f32.mrf.mxu0
        %v1108 = vpop.f32.mrf.mxu0
        %v1109 = vadd.f32 0.0, %v1108
        %v1110 = vpop.f32.mrf.mxu0
        %1111 = vdwg.mxu0
        %v1112 = vsel %vm686, %v1106, -inf
        %1113 = vmax.xlane.f32.xlu0 %v1112
        %v1114 = vpop.xlane.xlu0 %1113
        %v1115 = vsel %vm686, %v1109, -inf
        %1116 = vmax.xlane.f32.xlu0 %v1115
        %v1117 = vpop.xlane.xlu0 %1116
        %v1118 = vsub.f32 %v1106, %v1114
        %v1119 = vsub.f32 %v1109, %v1117
        %v1120 = vmul.f32 %v1118, 1.442695
        %v1121 = vpow.pop %v1120
        %v1122 = vmul.f32 %v1119, 1.442695
        %v1123 = vpow.pop %v1122
        %v1124 = vsel %vm686, %v1121, 0.0
        %1125 = vadd.xlane.f32.xlu0 %v1124
        %v1126 = vpop.xlane.xlu0 %1125
        %v1127 = vsel %vm686, %v1123, 0.0
        %1128 = vadd.xlane.f32.xlu0 %v1127
        %v1129 = vpop.xlane.xlu0 %1128
        %v1130 = vpack.c.bf16 %v1123, %v1121
        %v1132 = vsel %vm686, %v1130, 0
        %1134 = vmatprep.subr.bf16.mxu0 0
        %1135 = vmatpush1.bf16.msra.mxu0 0
        %1136 = vmatprep.subr.bf16.mxu0 0
        %1137 = vmatpush1.bf16.msra.mxu0 0
        %1138 = vmatprep.subr.bf16.mxu0 0
        %1139 = vmatpush1.bf16.msra.mxu0 0
        %1140 = vmatprep.subr.bf16.mxu0 0
        %1141 = vmatpush1.bf16.msra.mxu0 0
        %1142 = vmatprep.subr.bf16.mxu0 0
        %1143 = vmatpush1.bf16.msra.mxu0 0
        %1144 = vmatprep.subr.bf16.mxu0 0
        %1145 = vmatpush1.bf16.msra.mxu0 0
        %1146 = vmatprep.subr.bf16.mxu0 0
        %1147 = vmatpush1.bf16.msra.mxu0 0
        %1148 = vmatprep.subr.bf16.mxu0 0
        %1149 = vmatpush1.bf16.msra.mxu0 %v772
        %1150 = vmatprep.subr.bf16.mxu0 0
        %1151 = vmatpush2.bf16.msra.mxu0 0
        %1152 = vmatprep.subr.bf16.mxu0 0
        %1153 = vmatpush2.bf16.msra.mxu0 0
        %1154 = vmatprep.subr.bf16.mxu0 0
        %1155 = vmatpush2.bf16.msra.mxu0 0
        %1156 = vmatprep.subr.bf16.mxu0 0
        %1157 = vmatpush2.bf16.msra.mxu0 0
        %1158 = vmatprep.subr.bf16.mxu0 0
        %1159 = vmatpush2.bf16.msra.mxu0 0
        %1160 = vmatprep.subr.bf16.mxu0 0
        %1161 = vmatpush2.bf16.msra.mxu0 0
        %1162 = vmatprep.subr.bf16.mxu0 0
        %1163 = vmatpush2.bf16.msra.mxu0 0
        %1164 = vmatprep.subr.bf16.mxu0 0
        %1165 = vmatpush2.bf16.msra.mxu0 0
        %1166 = vmatprep.mubr.bf16.mxu0 0
        %1167 = vmatmul.mubr.bf16.gmra.mxu0 %v1132
        %v1168 = vpop.f32.mrf.mxu0
        %v1169 = vadd.f32 0.0, %v1168
        %v1170 = vpop.f32.mrf.mxu0
        %v1171 = vpop.f32.mrf.mxu0
        %v1172 = vadd.f32 0.0, %v1171
        %v1173 = vpop.f32.mrf.mxu0
        %1174 = vdwg.mxu0
        %v1175 = vrcp.pop %v1126
        %v1176 = vrcp.pop %v1129
        %v1177 = vmul.f32 %v1169, %v1175
        %v1178 = vmul.f32 %v1172, %v1176
        %1179 = vrot.lane.b32.xlu0 %v840, 32
        %v1180 = vpop.permute.xlu0 %1179
        %v1182 = vsel %vm537, %v1180, 0
        %1184 = vmatprep.subr.bf16.mxu0 0
        %1185 = vmatpush1.bf16.xpose.msra.mxu0 0
        %1186 = vmatprep.subr.bf16.mxu0 0
        %1187 = vmatpush1.bf16.xpose.msra.mxu0 0
        %1188 = vmatprep.subr.bf16.mxu0 0
        %1189 = vmatpush1.bf16.xpose.msra.mxu0 0
        %1190 = vmatprep.subr.bf16.mxu0 0
        %1191 = vmatpush1.bf16.xpose.msra.mxu0 0
        %1192 = vmatprep.subr.bf16.mxu0 0
        %1193 = vmatpush1.bf16.xpose.msra.mxu0 0
        %1194 = vmatprep.subr.bf16.mxu0 0
        %1195 = vmatpush1.bf16.xpose.msra.mxu0 0
        %1196 = vmatprep.subr.bf16.mxu0 0
        %1197 = vmatpush1.bf16.xpose.msra.mxu0 0
        %1198 = vmatprep.subr.bf16.mxu0 0
        %1199 = vmatpush1.bf16.xpose.msra.mxu0 %v1182
        %1200 = vmatprep.subr.bf16.mxu0 0
        %1201 = vmatpush2.bf16.xpose.msra.mxu0 0
        %1202 = vmatprep.subr.bf16.mxu0 0
        %1203 = vmatpush2.bf16.xpose.msra.mxu0 0
        %1204 = vmatprep.subr.bf16.mxu0 0
        %1205 = vmatpush2.bf16.xpose.msra.mxu0 0
        %1206 = vmatprep.subr.bf16.mxu0 0
        %1207 = vmatpush2.bf16.xpose.msra.mxu0 0
        %1208 = vmatprep.subr.bf16.mxu0 0
        %1209 = vmatpush2.bf16.xpose.msra.mxu0 0
        %1210 = vmatprep.subr.bf16.mxu0 0
        %1211 = vmatpush2.bf16.xpose.msra.mxu0 0
        %1212 = vmatprep.subr.bf16.mxu0 0
        %1213 = vmatpush2.bf16.xpose.msra.mxu0 0
        %1214 = vmatprep.subr.bf16.mxu0 0
        %1215 = vmatpush2.bf16.xpose.msra.mxu0 0
        %1216 = vmatprep.mubr.bf16.mxu0 0
        %1217 = vmatmul.mubr.bf16.gmra.mxu0 %v1182
        %v1218 = vpop.f32.mrf.mxu0
        %v1219 = vadd.f32 0.0, %v1218
        %v1220 = vpop.f32.mrf.mxu0
        %v1221 = vpop.f32.mrf.mxu0
        %v1222 = vadd.f32 0.0, %v1221
        %v1223 = vpop.f32.mrf.mxu0
        %1224 = vdwg.mxu0
        %v1225 = vsel %vm686, %v1219, -inf
        %1226 = vmax.xlane.f32.xlu0 %v1225
        %v1227 = vpop.xlane.xlu0 %1226
        %v1228 = vsel %vm686, %v1222, -inf
        %1229 = vmax.xlane.f32.xlu0 %v1228
        %v1230 = vpop.xlane.xlu0 %1229
        %v1231 = vsub.f32 %v1219, %v1227
        %v1232 = vsub.f32 %v1222, %v1230
        %v1233 = vmul.f32 %v1231, 1.442695
        %v1234 = vpow.pop %v1233
        %v1235 = vmul.f32 %v1232, 1.442695
        %v1236 = vpow.pop %v1235
        %v1237 = vsel %vm686, %v1234, 0.0
        %1238 = vadd.xlane.f32.xlu0 %v1237
        %v1239 = vpop.xlane.xlu0 %1238
        %v1240 = vsel %vm686, %v1236, 0.0
        %1241 = vadd.xlane.f32.xlu0 %v1240
        %v1242 = vpop.xlane.xlu0 %1241
        %v1243 = vpack.c.bf16 %v1236, %v1234
        %v1245 = vsel %vm686, %v1243, 0
        %1247 = vmatprep.subr.bf16.mxu0 0
        %1248 = vmatpush1.bf16.msra.mxu0 0
        %1249 = vmatprep.subr.bf16.mxu0 0
        %1250 = vmatpush1.bf16.msra.mxu0 0
        %1251 = vmatprep.subr.bf16.mxu0 0
        %1252 = vmatpush1.bf16.msra.mxu0 0
        %1253 = vmatprep.subr.bf16.mxu0 0
        %1254 = vmatpush1.bf16.msra.mxu0 0
        %1255 = vmatprep.subr.bf16.mxu0 0
        %1256 = vmatpush1.bf16.msra.mxu0 0
        %1257 = vmatprep.subr.bf16.mxu0 0
        %1258 = vmatpush1.bf16.msra.mxu0 0
        %1259 = vmatprep.subr.bf16.mxu0 0
        %1260 = vmatpush1.bf16.msra.mxu0 0
        %1261 = vmatprep.subr.bf16.mxu0 0
        %1262 = vmatpush1.bf16.msra.mxu0 %v772
        %1263 = vmatprep.subr.bf16.mxu0 0
        %1264 = vmatpush2.bf16.msra.mxu0 0
        %1265 = vmatprep.subr.bf16.mxu0 0
        %1266 = vmatpush2.bf16.msra.mxu0 0
        %1267 = vmatprep.subr.bf16.mxu0 0
        %1268 = vmatpush2.bf16.msra.mxu0 0
        %1269 = vmatprep.subr.bf16.mxu0 0
        %1270 = vmatpush2.bf16.msra.mxu0 0
        %1271 = vmatprep.subr.bf16.mxu0 0
        %1272 = vmatpush2.bf16.msra.mxu0 0
        %1273 = vmatprep.subr.bf16.mxu0 0
        %1274 = vmatpush2.bf16.msra.mxu0 0
        %1275 = vmatprep.subr.bf16.mxu0 0
        %1276 = vmatpush2.bf16.msra.mxu0 0
        %1277 = vmatprep.subr.bf16.mxu0 0
        %1278 = vmatpush2.bf16.msra.mxu0 0
        %1279 = vmatprep.mubr.bf16.mxu0 0
        %1280 = vmatmul.mubr.bf16.gmra.mxu0 %v1245
        %v1281 = vpop.f32.mrf.mxu0
        %v1282 = vadd.f32 0.0, %v1281
        %v1283 = vpop.f32.mrf.mxu0
        %v1284 = vpop.f32.mrf.mxu0
        %v1285 = vadd.f32 0.0, %v1284
        %v1286 = vpop.f32.mrf.mxu0
        %1287 = vdwg.mxu0
        %v1288 = vrcp.pop %v1239
        %v1289 = vrcp.pop %v1242
        %v1290 = vmul.f32 %v1282, %v1288
        %v1291 = vmul.f32 %v1285, %v1289
        %v1292 = vld [vmem:[%s8] sm:$0xf]
        %v1293 = vld [vmem:[%s8 + $0x4] sm:$0xf]
        %v1294 = vld [vmem:[%s8 + $0x8] sm:$0xf]
        %v1295 = vld [vmem:[%s8 + $0xc] sm:$0xf]
        %v1296 = vld [vmem:[%s8 + $0x10] sm:$0xf]
        %v1297 = vld [vmem:[%s8 + $0x14] sm:$0xf]
        %v1298 = vld [vmem:[%s8 + $0x18] sm:$0xf]
        %v1299 = vld [vmem:[%s8 + $0x1c] sm:$0xf]
        %v1300 = vld [vmem:[%s8 + $0x20] sm:$0xf]
        %v1301 = vld [vmem:[%s8 + $0x24] sm:$0xf]
        %v1302 = vld [vmem:[%s8 + $0x28] sm:$0xf]
        %v1303 = vld [vmem:[%s8 + $0x2c] sm:$0xf]
        %v1304 = vld [vmem:[%s8 + $0x30] sm:$0xf]
        %v1305 = vld [vmem:[%s8 + $0x34] sm:$0xf]
        %v1306 = vld [vmem:[%s8 + $0x38] sm:$0xf]
        %v1307 = vld [vmem:[%s8 + $0x3c] sm:$0xf]
        %v1308 = vld [vmem:[%s8 + $0x40] sm:$0xf]
        %v1309 = vld [vmem:[%s8 + $0x44] sm:$0xf]
        %v1310 = vld [vmem:[%s8 + $0x48] sm:$0xf]
        %v1311 = vld [vmem:[%s8 + $0x4c] sm:$0xf]
        %v1312 = vld [vmem:[%s9] sm:$0x1]
        %v1314 = vlaneseq
        %v1315 = vshrl.u32 %v1314, 7
        %v1316 = vsub.s32 0, %v1315
        %v1317 = vrot.slane %v1312, %v1316
        %v1323 = vunpack.c.l.b16 %v1292
        %v1324 = vunpack.c.l.b16 %v1293
        %v1325 = vunpack.c.l.b16 %v1294
        %v1326 = vunpack.c.l.b16 %v1295
        %v1327 = vpack.c.b16 %v1324, %v1323
        %v1328 = vpack.c.b16 %v1326, %v1325
        %1331 = vmatprep.subr.bf16.mxu0 0
        %1332 = vmatpush1.bf16.msra.mxu0 0
        %1333 = vmatprep.subr.bf16.mxu0 0
        %1334 = vmatpush1.bf16.msra.mxu0 0
        %1335 = vmatprep.subr.bf16.mxu0 0
        %1336 = vmatpush1.bf16.msra.mxu0 0
        %1337 = vmatprep.subr.bf16.mxu0 0
        %1338 = vmatpush1.bf16.msra.mxu0 0
        %1339 = vmatprep.subr.bf16.mxu0 0
        %1340 = vmatpush1.bf16.msra.mxu0 0
        %1341 = vmatprep.subr.bf16.mxu0 0
        %1342 = vmatpush1.bf16.msra.mxu0 0
        %1343 = vmatprep.subr.bf16.mxu0 0
        %1344 = vmatpush1.bf16.msra.mxu0 %v1328
        %1345 = vmatprep.subr.bf16.mxu0 0
        %1346 = vmatpush1.bf16.msra.mxu0 %v1327
        %1347 = vmatprep.subr.bf16.mxu0 0
        %1348 = vmatpush2.bf16.msra.mxu0 0
        %1349 = vmatprep.subr.bf16.mxu0 0
        %1350 = vmatpush2.bf16.msra.mxu0 0
        %1351 = vmatprep.subr.bf16.mxu0 0
        %1352 = vmatpush2.bf16.msra.mxu0 0
        %1353 = vmatprep.subr.bf16.mxu0 0
        %1354 = vmatpush2.bf16.msra.mxu0 0
        %1355 = vmatprep.subr.bf16.mxu0 0
        %1356 = vmatpush2.bf16.msra.mxu0 0
        %1357 = vmatprep.subr.bf16.mxu0 0
        %1358 = vmatpush2.bf16.msra.mxu0 0
        %1359 = vmatprep.subr.bf16.mxu0 0
        %1360 = vmatpush2.bf16.msra.mxu0 0
        %1361 = vmatprep.subr.bf16.mxu0 0
        %1362 = vmatpush2.bf16.msra.mxu0 0
        %1363 = vmatprep.mubr.bf16.mxu0 0
        %1364 = vmatmul.mubr.bf16.gmra.mxu0 %v797
        %v1365 = vpop.f32.mrf.mxu0
        %v1366 = vadd.f32 %v1317, %v1365
        %v1367 = vpop.f32.mrf.mxu0
        %v1368 = vpop.f32.mrf.mxu0
        %v1369 = vadd.f32 %v1317, %v1368
        %v1370 = vpop.f32.mrf.mxu0
        %1371 = vdwg.mxu0
        %v1372 = vpack.c.bf16 %v951, %v950
        %v1377 = vunpack.c.l.b16 %v1296
        %v1378 = vunpack.c.l.b16 %v1297
        %v1379 = vunpack.c.l.b16 %v1298
        %v1380 = vunpack.c.l.b16 %v1299
        %v1381 = vpack.c.b16 %v1378, %v1377
        %v1382 = vpack.c.b16 %v1380, %v1379
        %v1386 = vsel %vm537, %v1372, 0
        %1388 = vmatprep.subr.bf16.mxu0 0
        %1389 = vmatpush1.bf16.msra.mxu0 0
        %1390 = vmatprep.subr.bf16.mxu0 0
        %1391 = vmatpush1.bf16.msra.mxu0 0
        %1392 = vmatprep.subr.bf16.mxu0 0
        %1393 = vmatpush1.bf16.msra.mxu0 0
        %1394 = vmatprep.subr.bf16.mxu0 0
        %1395 = vmatpush1.bf16.msra.mxu0 0
        %1396 = vmatprep.subr.bf16.mxu0 0
        %1397 = vmatpush1.bf16.msra.mxu0 0
        %1398 = vmatprep.subr.bf16.mxu0 0
        %1399 = vmatpush1.bf16.msra.mxu0 0
        %1400 = vmatprep.subr.bf16.mxu0 0
        %1401 = vmatpush1.bf16.msra.mxu0 %v1382
        %1402 = vmatprep.subr.bf16.mxu0 0
        %1403 = vmatpush1.bf16.msra.mxu0 %v1381
        %1404 = vmatprep.subr.bf16.mxu0 0
        %1405 = vmatpush2.bf16.msra.mxu0 0
        %1406 = vmatprep.subr.bf16.mxu0 0
        %1407 = vmatpush2.bf16.msra.mxu0 0
        %1408 = vmatprep.subr.bf16.mxu0 0
        %1409 = vmatpush2.bf16.msra.mxu0 0
        %1410 = vmatprep.subr.bf16.mxu0 0
        %1411 = vmatpush2.bf16.msra.mxu0 0
        %1412 = vmatprep.subr.bf16.mxu0 0
        %1413 = vmatpush2.bf16.msra.mxu0 0
        %1414 = vmatprep.subr.bf16.mxu0 0
        %1415 = vmatpush2.bf16.msra.mxu0 0
        %1416 = vmatprep.subr.bf16.mxu0 0
        %1417 = vmatpush2.bf16.msra.mxu0 0
        %1418 = vmatprep.subr.bf16.mxu0 0
        %1419 = vmatpush2.bf16.msra.mxu0 0
        %1420 = vmatprep.mubr.bf16.mxu0 0
        %1421 = vmatmul.mubr.bf16.gmra.mxu0 %v1386
        %v1422 = vpop.f32.mrf.mxu0
        %v1423 = vadd.f32 0.0, %v1422
        %v1424 = vpop.f32.mrf.mxu0
        %v1425 = vpop.f32.mrf.mxu0
        %v1426 = vadd.f32 0.0, %v1425
        %v1427 = vpop.f32.mrf.mxu0
        %1428 = vdwg.mxu0
        %v1429 = vadd.f32 %v1366, %v1423
        %v1430 = vadd.f32 %v1369, %v1426
        %v1431 = vpack.c.bf16 %v1065, %v1064
        %v1436 = vunpack.c.l.b16 %v1300
        %v1437 = vunpack.c.l.b16 %v1301
        %v1438 = vunpack.c.l.b16 %v1302
        %v1439 = vunpack.c.l.b16 %v1303
        %v1440 = vpack.c.b16 %v1437, %v1436
        %v1441 = vpack.c.b16 %v1439, %v1438
        %v1445 = vsel %vm537, %v1431, 0
        %1447 = vmatprep.subr.bf16.mxu0 0
        %1448 = vmatpush1.bf16.msra.mxu0 0
        %1449 = vmatprep.subr.bf16.mxu0 0
        %1450 = vmatpush1.bf16.msra.mxu0 0
        %1451 = vmatprep.subr.bf16.mxu0 0
        %1452 = vmatpush1.bf16.msra.mxu0 0
        %1453 = vmatprep.subr.bf16.mxu0 0
        %1454 = vmatpush1.bf16.msra.mxu0 0
        %1455 = vmatprep.subr.bf16.mxu0 0
        %1456 = vmatpush1.bf16.msra.mxu0 0
        %1457 = vmatprep.subr.bf16.mxu0 0
        %1458 = vmatpush1.bf16.msra.mxu0 0
        %1459 = vmatprep.subr.bf16.mxu0 0
        %1460 = vmatpush1.bf16.msra.mxu0 %v1441
        %1461 = vmatprep.subr.bf16.mxu0 0
        %1462 = vmatpush1.bf16.msra.mxu0 %v1440
        %1463 = vmatprep.subr.bf16.mxu0 0
        %1464 = vmatpush2.bf16.msra.mxu0 0
        %1465 = vmatprep.subr.bf16.mxu0 0
        %1466 = vmatpush2.bf16.msra.mxu0 0
        %1467 = vmatprep.subr.bf16.mxu0 0
        %1468 = vmatpush2.bf16.msra.mxu0 0
        %1469 = vmatprep.subr.bf16.mxu0 0
        %1470 = vmatpush2.bf16.msra.mxu0 0
        %1471 = vmatprep.subr.bf16.mxu0 0
        %1472 = vmatpush2.bf16.msra.mxu0 0
        %1473 = vmatprep.subr.bf16.mxu0 0
        %1474 = vmatpush2.bf16.msra.mxu0 0
        %1475 = vmatprep.subr.bf16.mxu0 0
        %1476 = vmatpush2.bf16.msra.mxu0 0
        %1477 = vmatprep.subr.bf16.mxu0 0
        %1478 = vmatpush2.bf16.msra.mxu0 0
        %1479 = vmatprep.mubr.bf16.mxu0 0
        %1480 = vmatmul.mubr.bf16.gmra.mxu0 %v1445
        %v1481 = vpop.f32.mrf.mxu0
        %v1482 = vadd.f32 0.0, %v1481
        %v1483 = vpop.f32.mrf.mxu0
        %v1484 = vpop.f32.mrf.mxu0
        %v1485 = vadd.f32 0.0, %v1484
        %v1486 = vpop.f32.mrf.mxu0
        %1487 = vdwg.mxu0
        %v1488 = vadd.f32 %v1429, %v1482
        %v1489 = vadd.f32 %v1430, %v1485
        %v1490 = vpack.c.bf16 %v1178, %v1177
        %v1495 = vunpack.c.l.b16 %v1304
        %v1496 = vunpack.c.l.b16 %v1305
        %v1497 = vunpack.c.l.b16 %v1306
        %v1498 = vunpack.c.l.b16 %v1307
        %v1499 = vpack.c.b16 %v1496, %v1495
        %v1500 = vpack.c.b16 %v1498, %v1497
        %v1504 = vsel %vm537, %v1490, 0
        %1506 = vmatprep.subr.bf16.mxu0 0
        %1507 = vmatpush1.bf16.msra.mxu0 0
        %1508 = vmatprep.subr.bf16.mxu0 0
        %1509 = vmatpush1.bf16.msra.mxu0 0
        %1510 = vmatprep.subr.bf16.mxu0 0
        %1511 = vmatpush1.bf16.msra.mxu0 0
        %1512 = vmatprep.subr.bf16.mxu0 0
        %1513 = vmatpush1.bf16.msra.mxu0 0
        %1514 = vmatprep.subr.bf16.mxu0 0
        %1515 = vmatpush1.bf16.msra.mxu0 0
        %1516 = vmatprep.subr.bf16.mxu0 0
        %1517 = vmatpush1.bf16.msra.mxu0 0
        %1518 = vmatprep.subr.bf16.mxu0 0
        %1519 = vmatpush1.bf16.msra.mxu0 %v1500
        %1520 = vmatprep.subr.bf16.mxu0 0
        %1521 = vmatpush1.bf16.msra.mxu0 %v1499
        %1522 = vmatprep.subr.bf16.mxu0 0
        %1523 = vmatpush2.bf16.msra.mxu0 0
        %1524 = vmatprep.subr.bf16.mxu0 0
        %1525 = vmatpush2.bf16.msra.mxu0 0
        %1526 = vmatprep.subr.bf16.mxu0 0
        %1527 = vmatpush2.bf16.msra.mxu0 0
        %1528 = vmatprep.subr.bf16.mxu0 0
        %1529 = vmatpush2.bf16.msra.mxu0 0
        %1530 = vmatprep.subr.bf16.mxu0 0
        %1531 = vmatpush2.bf16.msra.mxu0 0
        %1532 = vmatprep.subr.bf16.mxu0 0
        %1533 = vmatpush2.bf16.msra.mxu0 0
        %1534 = vmatprep.subr.bf16.mxu0 0
        %1535 = vmatpush2.bf16.msra.mxu0 0
        %1536 = vmatprep.subr.bf16.mxu0 0
        %1537 = vmatpush2.bf16.msra.mxu0 0
        %1538 = vmatprep.mubr.bf16.mxu0 0
        %1539 = vmatmul.mubr.bf16.gmra.mxu0 %v1504
        %v1540 = vpop.f32.mrf.mxu0
        %v1541 = vadd.f32 0.0, %v1540
        %v1542 = vpop.f32.mrf.mxu0
        %v1543 = vpop.f32.mrf.mxu0
        %v1544 = vadd.f32 0.0, %v1543
        %v1545 = vpop.f32.mrf.mxu0
        %1546 = vdwg.mxu0
        %v1547 = vadd.f32 %v1488, %v1541
        %v1548 = vadd.f32 %v1489, %v1544
        %v1549 = vpack.c.bf16 %v1291, %v1290
        %v1554 = vunpack.c.l.b16 %v1308
        %v1555 = vunpack.c.l.b16 %v1309
        %v1556 = vunpack.c.l.b16 %v1310
        %v1557 = vunpack.c.l.b16 %v1311
        %v1558 = vpack.c.b16 %v1555, %v1554
        %v1559 = vpack.c.b16 %v1557, %v1556
        %v1563 = vsel %vm537, %v1549, 0
        %1565 = vmatprep.subr.bf16.mxu0 0
        %1566 = vmatpush1.bf16.msra.mxu0 0
        %1567 = vmatprep.subr.bf16.mxu0 0
        %1568 = vmatpush1.bf16.msra.mxu0 0
        %1569 = vmatprep.subr.bf16.mxu0 0
        %1570 = vmatpush1.bf16.msra.mxu0 0
        %1571 = vmatprep.subr.bf16.mxu0 0
        %1572 = vmatpush1.bf16.msra.mxu0 0
        %1573 = vmatprep.subr.bf16.mxu0 0
        %1574 = vmatpush1.bf16.msra.mxu0 0
        %1575 = vmatprep.subr.bf16.mxu0 0
        %1576 = vmatpush1.bf16.msra.mxu0 0
        %1577 = vmatprep.subr.bf16.mxu0 0
        %1578 = vmatpush1.bf16.msra.mxu0 %v1559
        %1579 = vmatprep.subr.bf16.mxu0 0
        %1580 = vmatpush1.bf16.msra.mxu0 %v1558
        %1581 = vmatprep.subr.bf16.mxu0 0
        %1582 = vmatpush2.bf16.msra.mxu0 0
        %1583 = vmatprep.subr.bf16.mxu0 0
        %1584 = vmatpush2.bf16.msra.mxu0 0
        %1585 = vmatprep.subr.bf16.mxu0 0
        %1586 = vmatpush2.bf16.msra.mxu0 0
        %1587 = vmatprep.subr.bf16.mxu0 0
        %1588 = vmatpush2.bf16.msra.mxu0 0
        %1589 = vmatprep.subr.bf16.mxu0 0
        %1590 = vmatpush2.bf16.msra.mxu0 0
        %1591 = vmatprep.subr.bf16.mxu0 0
        %1592 = vmatpush2.bf16.msra.mxu0 0
        %1593 = vmatprep.subr.bf16.mxu0 0
        %1594 = vmatpush2.bf16.msra.mxu0 0
        %1595 = vmatprep.subr.bf16.mxu0 0
        %1596 = vmatpush2.bf16.msra.mxu0 0
        %1597 = vmatprep.mubr.bf16.mxu0 0
        %1598 = vmatmul.mubr.bf16.gmra.mxu0 %v1563
        %v1599 = vpop.f32.mrf.mxu0
        %v1600 = vadd.f32 0.0, %v1599
        %v1601 = vpop.f32.mrf.mxu0
        %v1602 = vpop.f32.mrf.mxu0
        %v1603 = vadd.f32 0.0, %v1602
        %v1604 = vpop.f32.mrf.mxu0
        %1605 = vdwg.mxu0
        %v1606 = vadd.f32 %v1547, %v1600
        %v1607 = vadd.f32 %v1548, %v1603
        %v1608 = vmax.f32 %v1606, 0.0
        %v1609 = vmax.f32 %v1607, 0.0
        %v1610 = vpack.c.bf16 %v1609, %v1608
        %v1611 = vld [vmem:[%s10] sm:$0xf]
        %v1612 = vld [vmem:[%s10 + $0x4] sm:$0xf]
        %v1613 = vld [vmem:[%s10 + $0x8] sm:$0xf]
        %v1614 = vld [vmem:[%s10 + $0xc] sm:$0xf]
        %v1615 = vld [vmem:[%s11] sm:$0x1]
        %v1617 = vlaneseq
        %v1618 = vshrl.u32 %v1617, 7
        %v1619 = vsub.s32 0, %v1618
        %v1620 = vrot.slane %v1615, %v1619
        %v1626 = vunpack.c.l.b16 %v1611
        %v1627 = vunpack.c.l.b16 %v1612
        %v1628 = vunpack.c.l.b16 %v1613
        %v1629 = vunpack.c.l.b16 %v1614
        %v1630 = vpack.c.b16 %v1627, %v1626
        %v1631 = vpack.c.b16 %v1629, %v1628
        %v1635 = vsel %vm537, %v1610, 0
        %1637 = vmatprep.subr.bf16.mxu0 0
        %1638 = vmatpush1.bf16.msra.mxu0 0
        %1639 = vmatprep.subr.bf16.mxu0 0
        %1640 = vmatpush1.bf16.msra.mxu0 0
        %1641 = vmatprep.subr.bf16.mxu0 0
        %1642 = vmatpush1.bf16.msra.mxu0 0
        %1643 = vmatprep.subr.bf16.mxu0 0
        %1644 = vmatpush1.bf16.msra.mxu0 0
        %1645 = vmatprep.subr.bf16.mxu0 0
        %1646 = vmatpush1.bf16.msra.mxu0 0
        %1647 = vmatprep.subr.bf16.mxu0 0
        %1648 = vmatpush1.bf16.msra.mxu0 0
        %1649 = vmatprep.subr.bf16.mxu0 0
        %1650 = vmatpush1.bf16.msra.mxu0 %v1631
        %1651 = vmatprep.subr.bf16.mxu0 0
        %1652 = vmatpush1.bf16.msra.mxu0 %v1630
        %1653 = vmatprep.subr.bf16.mxu0 0
        %1654 = vmatpush2.bf16.msra.mxu0 0
        %1655 = vmatprep.subr.bf16.mxu0 0
        %1656 = vmatpush2.bf16.msra.mxu0 0
        %1657 = vmatprep.subr.bf16.mxu0 0
        %1658 = vmatpush2.bf16.msra.mxu0 0
        %1659 = vmatprep.subr.bf16.mxu0 0
        %1660 = vmatpush2.bf16.msra.mxu0 0
        %1661 = vmatprep.subr.bf16.mxu0 0
        %1662 = vmatpush2.bf16.msra.mxu0 0
        %1663 = vmatprep.subr.bf16.mxu0 0
        %1664 = vmatpush2.bf16.msra.mxu0 0
        %1665 = vmatprep.subr.bf16.mxu0 0
        %1666 = vmatpush2.bf16.msra.mxu0 0
        %1667 = vmatprep.subr.bf16.mxu0 0
        %1668 = vmatpush2.bf16.msra.mxu0 0
        %1669 = vmatprep.mubr.bf16.mxu0 0
        %1670 = vmatmul.mubr.bf16.gmra.mxu0 %v1635
        %v1671 = vpop.f32.mrf.mxu0
        %v1672 = vadd.f32 %v1620, %v1671
        %v1673 = vpop.f32.mrf.mxu0
        %v1674 = vpop.f32.mrf.mxu0
        %v1675 = vadd.f32 %v1620, %v1674
        %v1676 = vpop.f32.mrf.mxu0
        %1677 = vdwg.mxu0
        %v1678 = vmax.f32 %v1672, 0.0
        %v1679 = vmax.f32 %v1675, 0.0
        %v1680 = vpack.c.bf16 %v1679, %v1678
        %v1681 = vld [vmem:[%s12] sm:$0xf]
        %v1682 = vld [vmem:[%s12 + $0x4] sm:$0xf]
        %v1683 = vld [vmem:[%s12 + $0x8] sm:$0xf]
        %v1684 = vld [vmem:[%s12 + $0xc] sm:$0xf]
        %v1685 = vld [vmem:[%s13] sm:$0x1]
        %v1687 = vlaneseq
        %v1688 = vshrl.u32 %v1687, 7
        %v1689 = vsub.s32 0, %v1688
        %v1690 = vrot.slane %v1685, %v1689
        %v1696 = vunpack.c.l.b16 %v1681
        %v1697 = vunpack.c.l.b16 %v1682
        %v1698 = vunpack.c.l.b16 %v1683
        %v1699 = vunpack.c.l.b16 %v1684
        %v1700 = vpack.c.b16 %v1697, %v1696
        %v1701 = vpack.c.b16 %v1699, %v1698
        %v1705 = vsel %vm537, %v1680, 0
        %1707 = vmatprep.subr.bf16.mxu0 0
        %1708 = vmatpush1.bf16.msra.mxu0 0
        %1709 = vmatprep.subr.bf16.mxu0 0
        %1710 = vmatpush1.bf16.msra.mxu0 0
        %1711 = vmatprep.subr.bf16.mxu0 0
        %1712 = vmatpush1.bf16.msra.mxu0 0
        %1713 = vmatprep.subr.bf16.mxu0 0
        %1714 = vmatpush1.bf16.msra.mxu0 0
        %1715 = vmatprep.subr.bf16.mxu0 0
        %1716 = vmatpush1.bf16.msra.mxu0 0
        %1717 = vmatprep.subr.bf16.mxu0 0
        %1718 = vmatpush1.bf16.msra.mxu0 0
        %1719 = vmatprep.subr.bf16.mxu0 0
        %1720 = vmatpush1.bf16.msra.mxu0 %v1701
        %1721 = vmatprep.subr.bf16.mxu0 0
        %1722 = vmatpush1.bf16.msra.mxu0 %v1700
        %1723 = vmatprep.subr.bf16.mxu0 0
        %1724 = vmatpush2.bf16.msra.mxu0 0
        %1725 = vmatprep.subr.bf16.mxu0 0
        %1726 = vmatpush2.bf16.msra.mxu0 0
        %1727 = vmatprep.subr.bf16.mxu0 0
        %1728 = vmatpush2.bf16.msra.mxu0 0
        %1729 = vmatprep.subr.bf16.mxu0 0
        %1730 = vmatpush2.bf16.msra.mxu0 0
        %1731 = vmatprep.subr.bf16.mxu0 0
        %1732 = vmatpush2.bf16.msra.mxu0 0
        %1733 = vmatprep.subr.bf16.mxu0 0
        %1734 = vmatpush2.bf16.msra.mxu0 0
        %1735 = vmatprep.subr.bf16.mxu0 0
        %1736 = vmatpush2.bf16.msra.mxu0 0
        %1737 = vmatprep.subr.bf16.mxu0 0
        %1738 = vmatpush2.bf16.msra.mxu0 0
        %1739 = vmatprep.mubr.bf16.mxu0 0
        %1740 = vmatmul.mubr.bf16.gmra.mxu0 %v1705
        %v1741 = vpop.f32.mrf.mxu0
        %v1742 = vadd.f32 %v1690, %v1741
        %v1743 = vpop.f32.mrf.mxu0
        %v1744 = vpop.f32.mrf.mxu0
        %v1745 = vadd.f32 %v1690, %v1744
        %v1746 = vpop.f32.mrf.mxu0
        %1747 = vdwg.mxu0
        %v1748 = vld [vmem:[%s1] sm:$0xff]
        %v1749 = vld [vmem:[%s1 + $0x8] sm:$0xff]
        %v1750 = vadd.f32 %v1748, %v1742
        %v1751 = vadd.f32 %v1749, %v1745
        %vm1752 = vcmask 23552
        %1753 = vst.msk [vmem:[%s14] sm:$0xff] %vm1752, %v1750
        %1754 = vst.msk [vmem:[%s14 + $0x8] sm:$0xff] %vm1752, %v1751
      $region84: #{tpu_custom_call.1} parent=75 // pred_fallthru
        _
      // Predicated region
      $region85: #{tpu_custom_call.1} parent=75 // pred_check
        %p1755 = pneg %p352
      $region86: #{tpu_custom_call.1} parent=75 // pred_check_branch
        %1757 = sbr.rel (%p1755) target = $region88
      $region87: #{tpu_custom_call.1} parent=75 // pred_region
        _
      $region88: #{tpu_custom_call.1} parent=75 // pred_fallthru
        _
      // Predicated region
      $region89: #{tpu_custom_call.1} parent=75 // pred_check
        %p1758 = pneg %p352
      $region90: #{tpu_custom_call.1} parent=75 // pred_check_branch
        %1760 = sbr.rel (%p1758) target = $region92
      $region91: #{tpu_custom_call.1} parent=75 // pred_region
        _
      $region92: #{tpu_custom_call.1} parent=75 // pred_fallthru
        _
    $region76: #{tpu_custom_call.1} parent=5 // pred_fallthru
      _
    %p1761 = scmp.le.s32.totalorder 2, %s20
    // Predicated region
    $region93: #{tpu_custom_call.1} parent=5 // pred_check
      %p1762 = pneg %p1761
    $region94: #{tpu_custom_call.1} parent=5 // pred_check_branch
      %1764 = sbr.rel (%p1762) target = $region96
    $region95: #{tpu_custom_call.1} parent=5 // pred_region
      %s1765 = ssub.s32 %s20, 2
    $region96: #{tpu_custom_call.1} parent=5 // pred_fallthru
      _
  $region6: #{tpu_custom_call.1} parent=0 // loop_footer
    %s24 = sadd.s32 1, %s20
  $region7: #{tpu_custom_call.1} parent=0 // loop_footer_branch
    %19 = sbr.rel target = $region3
  $region8: #{tpu_custom_call.1} parent=0 // loop_exit
    _

</llo_original>
